<compile_context>
chip_gen: v7x
topology: tpu7x:2x2x1
jax: 0.10.0
libtpu: 0.0.40
codegen_flags: <defaults>
</compile_context>

<pallas_src>
import jax
import jax.numpy as jnp
from jax.experimental import pallas as pl
from jax.experimental.pallas import tpu as pltpu


def _conv1x1_kernel(x_ref, w_ref, b_ref, o_ref):
    # x_ref: (C_in, TP)   channels x pixel-tile (lane-dense)
    # w_ref: (C_out, C_in)
    # b_ref: (C_out, 1)   bias already includes the +5.0
    # o_ref: (C_out, TP)  lane-dense output tile
    acc = jnp.dot(w_ref[...], x_ref[...], preferred_element_type=jnp.float32)
    o_ref[...] = acc + b_ref[...]


def _select_pixel_tile(p, *, cap_pixels=16384):
    """Pick a lane-dense pixel tile (multiple of 128).

    Returns (tp, p_pad) with tp dividing p_pad.  When p is already a multiple
    of 128 there is no padding at all.  Prefers the *fewest* grid steps
    (per-step overhead dominates this tiny problem) while keeping >= 2 pixel
    blocks so the "parallel" pixel axis can shard across v7x's two
    TensorCores, and capping tp so the double-buffered VMEM footprint
    (~512 * tp bytes) stays well under scoped-VMEM defaults on all chips.
    """
    p_pad = ((p + 127) // 128) * 128      # lane-dense pixel extent (>= 128)
    q = p_pad // 128                      # number of 128-lane chunks
    cap_m = max(1, cap_pixels // 128)
    if q == 1:
        return 128, p_pad
    # Largest divisor m of q with m <= q // 2 (=> >= 2 blocks) and within cap.
    best = 1
    d = 1
    while d * d <= q:
        if q % d == 0:
            for m in (d, q // d):
                if m <= q // 2 and m <= cap_m and m > best:
                    best = m
        d += 1
    return 128 * best, p_pad


def conv1x1_plus5(x_nchw, weight_oc, bias_o):
    """x_nchw: (N, C_in, H, W); weight_oc: (C_out, C_in); bias_o: (C_out,)."""
    n, c_in, h, w = x_nchw.shape
    c_out = weight_oc.shape[0]
    p = h * w

    # NCHW -> (N, C_in, H*W): free reshape, pixels land on the lane axis.
    x_pix = x_nchw.reshape(n, c_in, p).astype(jnp.float32)
    # Fold the +5.0 into the bias once (54 floats, done outside the kernel).
    b_plus5 = (bias_o.astype(jnp.float32) + 5.0).reshape(c_out, 1)
    w_f32 = weight_oc.astype(jnp.float32)

    tp, p_pad = _select_pixel_tile(p)
    if p_pad != p:
        # Only taken when H*W is not a multiple of 128 (ragged / tiny images).
        x_pix = jnp.pad(x_pix, ((0, 0), (0, 0), (0, p_pad - p)))
    grid = (n, p_pad // tp)

    cost = pl.CostEstimate(
        flops=2 * n * p_pad * c_in * c_out,
        transcendentals=0,
        bytes_accessed=4 * (n * c_in * p_pad + w_f32.size + b_plus5.size
                            + n * c_out * p_pad),
    )

    out_pix = pl.pallas_call(
        _conv1x1_kernel,
        out_shape=jax.ShapeDtypeStruct((n, c_out, p_pad), jnp.float32),
        grid=grid,
        in_specs=[
            pl.BlockSpec((None, c_in, tp), lambda b, i: (b, 0, i)),
            pl.BlockSpec((c_out, c_in), lambda b, i: (0, 0)),
            pl.BlockSpec((c_out, 1), lambda b, i: (0, 0)),
        ],
        out_specs=pl.BlockSpec((None, c_out, tp), lambda b, i: (b, 0, i)),
        compiler_params=pltpu.CompilerParams(
            dimension_semantics=("parallel", "parallel"),
        ),
        cost_estimate=cost,
    )(x_pix, w_f32, b_plus5)

    if p_pad != p:
        out_pix = out_pix[:, :, :p]
    # (N, C_out, H*W) -> NCHW: free reshape, no transpose.
    return out_pix.reshape(n, c_out, h, w)


if __name__ == "__main__":
    key = jax.random.PRNGKey(0)
    k_x, k_w, k_b = jax.random.split(key, 3)

    # Shapes consistent with the module: Conv2d(3 -> 54, k=1), x = (1, 3, 64, 64)
    N, C_IN, H, W = 1, 3, 64, 64
    C_OUT = 54

    x = jax.random.normal(k_x, (N, C_IN, H, W), dtype=jnp.float32)
    # Deterministic parameter init (synthetic weights, not a checkpoint).
    weight = jax.random.normal(k_w, (C_OUT, C_IN), dtype=jnp.float32) * 0.1
    bias = jax.random.normal(k_b, (C_OUT,), dtype=jnp.float32) * 0.1

    out = conv1x1_plus5(x, weight, bias)
    out = jax.block_until_ready(out)

    # Reference check against plain JAX (same semantics as torch 1x1 conv + 5).
    ref = jnp.einsum("nchw,oc->nohw", x, weight) + bias[None, :, None, None] + 5.0
    assert out.shape == (N, C_OUT, H, W)
    assert jnp.allclose(out, ref, atol=1e-4, rtol=1e-4)

    print("KERNEL_OK")
</pallas_src>

<mosaic_0001>
module attributes {stable_mosaic.version = 11 : i64} {
  func.func @_conv1x1_kernel(%arg0: i32, %arg1: i32, %arg2: memref<1x3x2048xf32, #tpu.memory_space<vmem>>, %arg3: memref<54x3xf32, #tpu.memory_space<vmem>>, %arg4: memref<54x1xf32, #tpu.memory_space<vmem>>, %arg5: memref<1x54x2048xf32, #tpu.memory_space<vmem>>) attributes {dimension_semantics = [#tpu.dimension_semantics<parallel>, #tpu.dimension_semantics<parallel>], iteration_bounds = array<i64: 1, 2>, scalar_prefetch = 0 : i64, scratch_operands = 0 : i64, tpu.core_type = #tpu.core_type<tc>, window_params = [{transform_indices = @transform_0, window_bounds = array<i64: 1, 3, 2048>}, {pipeline_mode = #tpu.pipeline_mode<synchronous>, transform_indices = @transform_1, window_bounds = array<i64: 54, 3>}, {pipeline_mode = #tpu.pipeline_mode<synchronous>, transform_indices = @transform_2, window_bounds = array<i64: 54, 1>}, {transform_indices = @transform_3, window_bounds = array<i64: 1, 54, 2048>}]} {
    %c0 = arith.constant 0 : index
    %c0_0 = arith.constant 0 : index
    %0 = vector.load %arg3[%c0, %c0_0] : memref<54x3xf32, #tpu.memory_space<vmem>>, vector<54x3xf32>
    %c0_1 = arith.constant 0 : index
    %c0_2 = arith.constant 0 : index
    %c0_3 = arith.constant 0 : index
    %1 = vector.load %arg2[%c0_1, %c0_2, %c0_3] : memref<1x3x2048xf32, #tpu.memory_space<vmem>>, vector<1x3x2048xf32>
    %2 = vector.shape_cast %1 : vector<1x3x2048xf32> to vector<3x2048xf32>
    %cst = arith.constant dense<0.000000e+00> : vector<54x2048xf32>
    %3 = tpu.matmul %0, %2, %cst {dimension_numbers = #tpu.dot_dimension_numbers<[1], [0], [0], [1], [0, 0, 1, 1], [], []>} : vector<54x3xf32>, vector<3x2048xf32>, vector<54x2048xf32> -> vector<54x2048xf32>
    %c0_4 = arith.constant 0 : index
    %c0_5 = arith.constant 0 : index
    %4 = vector.load %arg4[%c0_4, %c0_5] : memref<54x1xf32, #tpu.memory_space<vmem>>, vector<54x1xf32>
    %5 = vector.broadcast %4 : vector<54x1xf32> to vector<54x2048xf32>
    %6 = arith.addf %3, %5 : vector<54x2048xf32>
    %c0_6 = arith.constant 0 : index
    %c0_7 = arith.constant 0 : index
    %c0_8 = arith.constant 0 : index
    %7 = vector.load %arg5[%c0_6, %c0_7, %c0_8] : memref<1x54x2048xf32, #tpu.memory_space<vmem>>, vector<1x54x2048xf32>
    %8 = vector.shape_cast %7 : vector<1x54x2048xf32> to vector<54x2048xf32>
    %9 = vector.shape_cast %6 : vector<54x2048xf32> to vector<1x54x2048xf32>
    tpu.vector_store %arg5[%c0_6, %c0_7, %c0_8], %9 {strides = array<i32>} : memref<1x54x2048xf32, #tpu.memory_space<vmem>>, vector<1x54x2048xf32>,
    return
  }
  func.func @transform_0(%arg0: i32, %arg1: i32) -> (i32, i32, i32) {
    %c0_i32 = arith.constant 0 : i32
    %c0_i32_0 = arith.constant 0 : i32
    return %arg0, %c0_i32, %arg1 : i32, i32, i32
  }
  func.func @transform_1(%arg0: i32, %arg1: i32) -> (i32, i32) {
    %c0_i32 = arith.constant 0 : i32
    %c0_i32_0 = arith.constant 0 : i32
    %c0_i32_1 = arith.constant 0 : i32
    return %c0_i32, %c0_i32_0 : i32, i32
  }
  func.func @transform_2(%arg0: i32, %arg1: i32) -> (i32, i32) {
    %c0_i32 = arith.constant 0 : i32
    %c0_i32_0 = arith.constant 0 : i32
    %c0_i32_1 = arith.constant 0 : i32
    return %c0_i32, %c0_i32_0 : i32, i32
  }
  func.func @transform_3(%arg0: i32, %arg1: i32) -> (i32, i32, i32) {
    %c0_i32 = arith.constant 0 : i32
    %c0_i32_0 = arith.constant 0 : i32
    return %arg0, %c0_i32, %arg1 : i32, i32, i32
  }
}

</mosaic_0001>

<llo_original>
// kernel: tpu_custom_call.1
$region0: #{tpu_custom_call.1}
  #allocation0 [shape = 'u32[]', space=smem, size = 0x4, offset = 0x4, fixed_abs, tag = 'smem constant byte address 0x4 - core index']
  #allocation1 [shape = 'u32[144,128]{1,0:T(1,128)}', space=vmem, size = 0x12000, scoped, tag = 'internal scratch']
  %s0 = inlined_call_operand.vmem [shape: f32[1,3,4096], index: 0, kind: input, shape index: {}]
  %s1 = inlined_call_operand.vmem [shape: f32[54,3], index: 1, kind: input, shape index: {}]
  %s2 = inlined_call_operand.vmem [shape: f32[54,1], index: 2, kind: input, shape index: {}]
  %s3 = inlined_call_operand.vmem [shape: f32[1,54,4096], index: 3, kind: output, shape index: {}]
  %s4 = sld [smem:[#allocation0]]
  $region64: #{tpu_custom_call.1} parent=0
    _
  %s6 = ssub.s32 1, %s4
  %s7 = scalar_select 0, %s6, %s4
  $region1: #{tpu_custom_call.1} parent=0
    #allocation2 [shape = 'u8[917504]{0}', space=vmem, size = 0xe0000, scoped, tag = 'output window, operand 0']
    loop: start=0, step=1, limit=4
    $region2: #{tpu_custom_call.1} parent=1 // loop_pre_header
      _
    $region3: #{tpu_custom_call.1} parent=1 // loop_header
      %s9 = sphi 0, %s13
      %p10 = scmp.ge.s32.totalorder %s9, 4
      %s16 = sphi 0, %s28
      %s17 = sphi 0, %s24
      %s18 = sphi 0, %s16
      %s19 = sphi 0, %s17
      %s20 = sphi 0, %s18
      %s21 = sphi 0, %s19
      %s33 = sphi 0, %s35
      %s36 = sphi 0, %s33
      %s37 = sphi 0, %s36
      %s53 = sphi 0, %s37
      %s57 = sphi 0, %s57
      %s59 = sphi 0, %s57
      %s60 = sphi 0, %s59
      %s74 = sphi 0, %s60
      %s78 = sphi 0, %s78
      %s80 = sphi 0, %s78
      %s81 = sphi 0, %s80
      %s95 = sphi 0, %s81
      %s103 = sphi 0, %s105
      %s106 = sphi 0, %s103
      %s107 = sphi 0, %s106
      %s123 = sphi 0, %s107
    $region4: #{tpu_custom_call.1} parent=1 // loop_header_branch
      %12 = sbr.rel (%p10) target = $region8
    $region5: #{tpu_custom_call.1} parent=1 // loop_body
      %s14 = ssub.s32 %s9, 1
      %s15 = ssub.s32 %s9, 2
      %s22 = sadd.s32 1, %s17
      %p23 = scmp.ge.s32.totalorder %s22, 2
      %s24 = scalar_select %p23, 0, %s22
      %s25 = sadd.s32 1, %s16
      %s26 = scalar_select %p23, %s25, %s16
      %p27 = scmp.ge.s32.totalorder %s26, 1
      %s28 = scalar_select %p27, 0, %s26
      %s29 = ssub.s32 %s16, %s28
      %s30 = ssub.s32 %s17, %s24
      %s31 = sor.u32 %s29, %s30
      %p32 = scmp.eq.s32.totalorder %s31, 0
      %s34 = sadd.s32 %s33, 1
      %s35 = scalar_select %p32, %s33, %s34
      %p38 = pneg %p32
      %p39 = scmp.eq.s32.totalorder %s9, 1
      %p40 = por %p38, %p39
      %p41 = scmp.ne.s32.totalorder %s33, %s36
      %p42 = scmp.eq.s32.totalorder %s9, 0
      %p43 = por %p41, %p42
      %p44 = scmp.ne.s32.totalorder %s33, %s36
      %p45 = scmp.eq.s32.totalorder %s14, 1
      %p46 = por %p44, %p45
      %p47 = scmp.ne.s32.totalorder %s36, %s37
      %p48 = scmp.eq.s32.totalorder %s14, 0
      %p49 = por %p47, %p48
      %p50 = scmp.ne.s32.totalorder %s36, %s37
      %p51 = scmp.eq.s32.totalorder %s15, 1
      %p52 = por %p50, %p51
      %p54 = scmp.ne.s32.totalorder %s37, %s53
      %p55 = scmp.eq.s32.totalorder %s15, 0
      %p56 = por %p54, %p55
      %s58 = sadd.s32 %s57, 1
      %p61 = scmp.eq.s32.totalorder %s9, 1
      %p62 = scmp.ne.s32.totalorder %s57, %s59
      %p63 = scmp.eq.s32.totalorder %s9, 0
      %p64 = por %p62, %p63
      %p65 = scmp.ne.s32.totalorder %s57, %s59
      %p66 = scmp.eq.s32.totalorder %s14, 1
      %p67 = por %p65, %p66
      %p68 = scmp.ne.s32.totalorder %s59, %s60
      %p69 = scmp.eq.s32.totalorder %s14, 0
      %p70 = por %p68, %p69
      %p71 = scmp.ne.s32.totalorder %s59, %s60
      %p72 = scmp.eq.s32.totalorder %s15, 1
      %p73 = por %p71, %p72
      %p75 = scmp.ne.s32.totalorder %s60, %s74
      %p76 = scmp.eq.s32.totalorder %s15, 0
      %p77 = por %p75, %p76
      %s79 = sadd.s32 %s78, 1
      %p82 = scmp.eq.s32.totalorder %s9, 1
      %p83 = scmp.ne.s32.totalorder %s78, %s80
      %p84 = scmp.eq.s32.totalorder %s9, 0
      %p85 = por %p83, %p84
      %p86 = scmp.ne.s32.totalorder %s78, %s80
      %p87 = scmp.eq.s32.totalorder %s14, 1
      %p88 = por %p86, %p87
      %p89 = scmp.ne.s32.totalorder %s80, %s81
      %p90 = scmp.eq.s32.totalorder %s14, 0
      %p91 = por %p89, %p90
      %p92 = scmp.ne.s32.totalorder %s80, %s81
      %p93 = scmp.eq.s32.totalorder %s15, 1
      %p94 = por %p92, %p93
      %p96 = scmp.ne.s32.totalorder %s81, %s95
      %p97 = scmp.eq.s32.totalorder %s15, 0
      %p98 = por %p96, %p97
      %s99 = ssub.s32 %s16, %s28
      %s100 = ssub.s32 %s17, %s24
      %s101 = sor.u32 %s99, %s100
      %p102 = scmp.eq.s32.totalorder %s101, 0
      %s104 = sadd.s32 %s103, 1
      %s105 = scalar_select %p102, %s103, %s104
      %p108 = pneg %p102
      %p109 = scmp.eq.s32.totalorder %s9, 1
      %p110 = por %p108, %p109
      %p111 = scmp.ne.s32.totalorder %s103, %s106
      %p112 = scmp.eq.s32.totalorder %s9, 0
      %p113 = por %p111, %p112
      %p114 = scmp.ne.s32.totalorder %s103, %s106
      %p115 = scmp.eq.s32.totalorder %s14, 1
      %p116 = por %p114, %p115
      %p117 = scmp.ne.s32.totalorder %s106, %s107
      %p118 = scmp.eq.s32.totalorder %s14, 0
      %p119 = por %p117, %p118
      %p120 = scmp.ne.s32.totalorder %s106, %s107
      %p121 = scmp.eq.s32.totalorder %s15, 1
      %p122 = por %p120, %p121
      %p124 = scmp.ne.s32.totalorder %s107, %s123
      %p125 = scmp.eq.s32.totalorder %s15, 0
      %p126 = por %p124, %p125
      %p127 = scmp.le.s32.totalorder 1, %s9
      %p128 = scmp.lt.s32.totalorder %s9, 3
      %p129 = pnand %p127, %p128
      %p130 = pneg %p129
      // Predicated region
      $region9: #{tpu_custom_call.1} parent=5 // pred_check
        _
      $region10: #{tpu_custom_call.1} parent=5 // pred_check_branch
        %132 = sbr.rel (%p129) target = $region12
      $region11: #{tpu_custom_call.1} parent=5 // pred_region
        %s133 = ssub.s32 %s9, 1
        // Predicated region
        $region13: #{tpu_custom_call.1} parent=11 // pred_check
          %p134 = pneg %p70
        $region14: #{tpu_custom_call.1} parent=11 // pred_check_branch
          %136 = sbr.rel (%p134) target = $region16
        $region15: #{tpu_custom_call.1} parent=11 // pred_region
          _
        $region16: #{tpu_custom_call.1} parent=11 // pred_fallthru
          _
        // Predicated region
        $region17: #{tpu_custom_call.1} parent=11 // pred_check
          %p137 = pneg %p91
        $region18: #{tpu_custom_call.1} parent=11 // pred_check_branch
          %139 = sbr.rel (%p137) target = $region20
        $region19: #{tpu_custom_call.1} parent=11 // pred_region
          _
        $region20: #{tpu_custom_call.1} parent=11 // pred_fallthru
          _
      $region12: #{tpu_custom_call.1} parent=5 // pred_fallthru
        _
      %p140 = scmp.lt.s32.totalorder %s9, 2
      // Predicated region
      $region21: #{tpu_custom_call.1} parent=5 // pred_check
        %p141 = pneg %p140
      $region22: #{tpu_custom_call.1} parent=5 // pred_check_branch
        %143 = sbr.rel (%p141) target = $region24
      $region23: #{tpu_custom_call.1} parent=5 // pred_region
        // Predicated region
        $region25: #{tpu_custom_call.1} parent=23 // pred_check
          %p144 = pneg %p43
        $region26: #{tpu_custom_call.1} parent=23 // pred_check_branch
          %146 = sbr.rel (%p144) target = $region28
        $region27: #{tpu_custom_call.1} parent=23 // pred_region
          %s147 = smul.u32 16, %s17
          %p148 = scmp.lt.s32.totalorder %s16, 0
          %s149 = scalar_select %p148, %s16, 0
          %p150 = scmp.lt.s32.totalorder %s147, 31
          %s151 = scalar_select %p150, %s147, 31
          %s152 = smul.addr %s149, 32
          %s153 = sadd.s32 %s151, %s152
          %s154 = smul.addr %s153, 4
          %s155 = scalar_lea.vmem %s0, %s154
          %s156 = smul.u32 16, %s17
        $region28: #{tpu_custom_call.1} parent=23 // pred_fallthru
          _
      $region24: #{tpu_custom_call.1} parent=5 // pred_fallthru
        _
      %p157 = scmp.le.s32.totalorder 1, %s9
      %p158 = scmp.lt.s32.totalorder %s9, 3
      %p159 = pnand %p157, %p158
      %p160 = pneg %p159
      // Predicated region
      $region29: #{tpu_custom_call.1} parent=5 // pred_check
        _
      $region30: #{tpu_custom_call.1} parent=5 // pred_check_branch
        %162 = sbr.rel (%p159) target = $region32
      $region31: #{tpu_custom_call.1} parent=5 // pred_region
        %s163 = ssub.s32 %s9, 1
        %s164 = smul.u32 16, %s19
        %p165 = scmp.lt.s32.totalorder %s18, 0
        %s166 = scalar_select %p165, %s18, 0
        %p167 = scmp.lt.s32.totalorder %s164, 31
        %s168 = scalar_select %p167, %s164, 31
        %s169 = smul.addr %s166, 32
        %s170 = sadd.s32 %s168, %s169
        %s171 = smul.addr %s170, 4
        %s172 = scalar_lea.vmem %s0, %s171
        %p173 = pneg %p49
        %p174 = pneg %p46
        %p175 = pneg %p70
        %p176 = pneg %p67
        %p177 = pneg %p91
        %p178 = pneg %p88
        %p179 = pneg %p119
        %p180 = pneg %p116
        %s181 = sand.u32 %s106, 1
        %s182 = sand.u32 %s106, 1
        %s183 = smul.addr %s182, 896
        %s184 = scalar_lea.vmem [#allocation2], %s183
        %s185 = smul.u32 16, %s19
        %p186 = scmp.lt.s32.totalorder %s18, 0
        %s187 = scalar_select %p186, %s18, 0
        %p188 = scmp.lt.s32.totalorder %s185, 31
        %s189 = scalar_select %p188, %s185, 31
        %s190 = smul.addr %s187, 32
        %s191 = sadd.s32 %s189, %s190
        %s192 = smul.addr %s191, 4
        %s193 = scalar_lea.vmem %s0, %s192
        %s194 = smul.u32 16, %s19
        %s195 = smul.u32 16, %s19
        %v196 = vld [vmem:[%s1] sm:$0xff]
        %v197 = vld [vmem:[%s1 + $0x8] sm:$0xff]
        %v198 = vld [vmem:[%s1 + $0x10] sm:$0xff]
        %v199 = vld [vmem:[%s1 + $0x18] sm:$0xff]
        %v200 = vld [vmem:[%s1 + $0x20] sm:$0xff]
        %v201 = vld [vmem:[%s1 + $0x28] sm:$0xff]
        %v202 = vld [vmem:[%s1 + $0x30] sm:$0x3f]
        %v203 = vld [vmem:[%s193] sm:$0x77]
        %v204 = vld [vmem:[%s193 + $0x8] sm:$0x77]
        %v205 = vld [vmem:[%s193 + $0x10] sm:$0x77]
        %v206 = vld [vmem:[%s193 + $0x18] sm:$0x77]
        %v207 = vld [vmem:[%s193 + $0x20] sm:$0x77]
        %v208 = vld [vmem:[%s193 + $0x28] sm:$0x77]
        %v209 = vld [vmem:[%s193 + $0x30] sm:$0x77]
        %v210 = vld [vmem:[%s193 + $0x38] sm:$0x77]
        %v211 = vld [vmem:[%s2] sm:$0xff]
        %v212 = vld [vmem:[%s2 + $0x8] sm:$0xff]
        %v213 = vld [vmem:[%s2 + $0x10] sm:$0xff]
        %v214 = vld [vmem:[%s2 + $0x18] sm:$0xff]
        %v215 = vld [vmem:[%s2 + $0x20] sm:$0xff]
        %v216 = vld [vmem:[%s2 + $0x28] sm:$0xff]
        %v217 = vld [vmem:[%s2 + $0x30] sm:$0x3f]
        %219 = vset.pattern.permute.xlu0 0
        %220 = vperm.xlu0 %219, %v211
        %v221 = vpop.permute.xlu0 %220
        %224 = vset.pattern.permute.xlu0 0
        %225 = vperm.xlu0 %224, %v212
        %v226 = vpop.permute.xlu0 %225
        %229 = vset.pattern.permute.xlu0 0
        %230 = vperm.xlu0 %229, %v213
        %v231 = vpop.permute.xlu0 %230
        %234 = vset.pattern.permute.xlu0 0
        %235 = vperm.xlu0 %234, %v214
        %v236 = vpop.permute.xlu0 %235
        %239 = vset.pattern.permute.xlu0 0
        %240 = vperm.xlu0 %239, %v215
        %v241 = vpop.permute.xlu0 %240
        %244 = vset.pattern.permute.xlu0 0
        %245 = vperm.xlu0 %244, %v216
        %v246 = vpop.permute.xlu0 %245
        %249 = vset.pattern.permute.xlu0 0
        %250 = vperm.xlu0 %249, %v217
        %v251 = vpop.permute.xlu0 %250
        %v261 = vcombine.high %v203, %v203
        %v262 = vcombine.high %v204, %v204
        %v263 = vcombine.high %v205, %v205
        %v264 = vcombine.high %v206, %v206
        %v265 = vcombine.high %v207, %v207
        %v266 = vcombine.high %v208, %v208
        %v267 = vcombine.high %v209, %v209
        %v268 = vcombine.high %v210, %v210
        %vm269 = vcmask 23552
        %v271 = vsel %vm269, %v196, 0
        %v274 = vsel %vm269, %v197, 0
        %v277 = vsel %vm269, %v198, 0
        %v280 = vsel %vm269, %v199, 0
        %v283 = vsel %vm269, %v200, 0
        %v286 = vsel %vm269, %v201, 0
        %v289 = vsel %vm269, %v202, 0
        %vm291 = vcmask 1042432
        %v292 = vsel %vm291, %v203, 0
        %v294 = vsel %vm291, %v261, 0
        %v296 = vsel %vm291, %v204, 0
        %v298 = vsel %vm291, %v262, 0
        %v300 = vsel %vm291, %v205, 0
        %v302 = vsel %vm291, %v263, 0
        %v304 = vsel %vm291, %v206, 0
        %v306 = vsel %vm291, %v264, 0
        %v308 = vsel %vm291, %v207, 0
        %v310 = vsel %vm291, %v265, 0
        %v312 = vsel %vm291, %v208, 0
        %v314 = vsel %vm291, %v266, 0
        %v316 = vsel %vm291, %v209, 0
        %v318 = vsel %vm291, %v267, 0
        %v320 = vsel %vm291, %v210, 0
        %v322 = vsel %vm291, %v268, 0
        %324 = vmatprep.subr.mxu0 %v294
        %325 = vmatpush1.msra.mxu0 %v292
        %326 = vmatprep.subr.mxu0 0.0
        %327 = vmatpush1.msra.mxu0 0.0
        %328 = vmatprep.subr.mxu0 0.0
        %329 = vmatpush1.msra.mxu0 0.0
        %330 = vmatprep.subr.mxu0 0.0
        %331 = vmatpush1.msra.mxu0 0.0
        %332 = vmatprep.subr.mxu0 0.0
        %333 = vmatpush1.msra.mxu0 0.0
        %334 = vmatprep.subr.mxu0 0.0
        %335 = vmatpush1.msra.mxu0 0.0
        %336 = vmatprep.subr.mxu0 0.0
        %337 = vmatpush1.msra.mxu0 0.0
        %338 = vmatprep.subr.mxu0 0.0
        %339 = vmatpush1.msra.mxu0 0.0
        %340 = vmatprep.subr.mxu0 0.0
        %341 = vmatpush1.msra.mxu0 0.0
        %342 = vmatprep.subr.mxu0 0.0
        %343 = vmatpush1.msra.mxu0 0.0
        %344 = vmatprep.subr.mxu0 0.0
        %345 = vmatpush1.msra.mxu0 0.0
        %346 = vmatprep.subr.mxu0 0.0
        %347 = vmatpush1.msra.mxu0 0.0
        %348 = vmatprep.subr.mxu0 0.0
        %349 = vmatpush1.msra.mxu0 0.0
        %350 = vmatprep.subr.mxu0 0.0
        %351 = vmatpush1.msra.mxu0 0.0
        %352 = vmatprep.subr.mxu0 0.0
        %353 = vmatpush1.msra.mxu0 0.0
        %354 = vmatprep.subr.mxu0 0.0
        %355 = vmatpush1.msra.mxu0 0.0
        %356 = vmatprep.subr.mxu0 0.0
        %357 = vmatpush1.msra.mxu0 0.0
        %358 = vmatprep.subr.mxu0 0.0
        %359 = vmatpush1.msra.mxu0 0.0
        %360 = vmatprep.subr.mxu0 0.0
        %361 = vmatpush1.msra.mxu0 0.0
        %362 = vmatprep.subr.mxu0 0.0
        %363 = vmatpush1.msra.mxu0 0.0
        %364 = vmatprep.subr.mxu0 0.0
        %365 = vmatpush1.msra.mxu0 0.0
        %366 = vmatprep.subr.mxu0 0.0
        %367 = vmatpush1.msra.mxu0 0.0
        %368 = vmatprep.subr.mxu0 0.0
        %369 = vmatpush1.msra.mxu0 0.0
        %370 = vmatprep.subr.mxu0 0.0
        %371 = vmatpush1.msra.mxu0 0.0
        %372 = vmatprep.subr.mxu0 0.0
        %373 = vmatpush1.msra.mxu0 0.0
        %374 = vmatprep.subr.mxu0 0.0
        %375 = vmatpush1.msra.mxu0 0.0
        %376 = vmatprep.subr.mxu0 0.0
        %377 = vmatpush1.msra.mxu0 0.0
        %378 = vmatprep.subr.mxu0 0.0
        %379 = vmatpush1.msra.mxu0 0.0
        %380 = vmatprep.subr.mxu0 0.0
        %381 = vmatpush1.msra.mxu0 0.0
        %382 = vmatprep.subr.mxu0 0.0
        %383 = vmatpush1.msra.mxu0 0.0
        %384 = vmatprep.subr.mxu0 0.0
        %385 = vmatpush1.msra.mxu0 0.0
        %386 = vmatprep.subr.mxu0 0.0
        %387 = vmatpush1.msra.mxu0 0.0
        %388 = vmatprep.mubr.f32.mxu0 0.0
        %389 = vmatmul.mubr.f32.gmra.mrb[0].mxu0 %v271
        %v390 = vpop.f32.mrb[0].mxu0
        %v391 = vadd.f32 %v221, %v390
        %v392 = vpop.f32.mrb[0].mxu0
        %v393 = vadd.f32 %v221, %v392
        %394 = vmatprep.mubr.f32.mxu0 0.0
        %395 = vmatmul.mubr.f32.gmra.mrb[0].mxu0 %v274
        %v396 = vpop.f32.mrb[0].mxu0
        %v397 = vadd.f32 %v226, %v396
        %v398 = vpop.f32.mrb[0].mxu0
        %v399 = vadd.f32 %v226, %v398
        %400 = vmatprep.mubr.f32.mxu0 0.0
        %401 = vmatmul.mubr.f32.gmra.mrb[0].mxu0 %v277
        %v402 = vpop.f32.mrb[0].mxu0
        %v403 = vadd.f32 %v231, %v402
        %v404 = vpop.f32.mrb[0].mxu0
        %v405 = vadd.f32 %v231, %v404
        %406 = vmatprep.mubr.f32.mxu0 0.0
        %407 = vmatmul.mubr.f32.gmra.mrb[0].mxu0 %v280
        %v408 = vpop.f32.mrb[0].mxu0
        %v409 = vadd.f32 %v236, %v408
        %v410 = vpop.f32.mrb[0].mxu0
        %v411 = vadd.f32 %v236, %v410
        %412 = vmatprep.mubr.f32.mxu0 0.0
        %413 = vmatmul.mubr.f32.gmra.mrb[0].mxu0 %v283
        %v414 = vpop.f32.mrb[0].mxu0
        %v415 = vadd.f32 %v241, %v414
        %v416 = vpop.f32.mrb[0].mxu0
        %v417 = vadd.f32 %v241, %v416
        %418 = vmatprep.mubr.f32.mxu0 0.0
        %419 = vmatmul.mubr.f32.gmra.mrb[0].mxu0 %v286
        %v420 = vpop.f32.mrb[0].mxu0
        %v421 = vadd.f32 %v246, %v420
        %v422 = vpop.f32.mrb[0].mxu0
        %v423 = vadd.f32 %v246, %v422
        %424 = vmatprep.mubr.f32.mxu0 0.0
        %425 = vmatmul.mubr.f32.gmra.mrb[0].mxu0 %v289
        %v426 = vpop.f32.mrb[0].mxu0
        %v427 = vadd.f32 %v251, %v426
        %v428 = vpop.f32.mrb[0].mxu0
        %v429 = vadd.f32 %v251, %v428
        %430 = vdwg.mxu0
        %431 = vmatprep.subr.mxu0 %v298
        %432 = vmatpush1.msra.mxu0 %v296
        %433 = vmatprep.subr.mxu0 0.0
        %434 = vmatpush1.msra.mxu0 0.0
        %435 = vmatprep.subr.mxu0 0.0
        %436 = vmatpush1.msra.mxu0 0.0
        %437 = vmatprep.subr.mxu0 0.0
        %438 = vmatpush1.msra.mxu0 0.0
        %439 = vmatprep.subr.mxu0 0.0
        %440 = vmatpush1.msra.mxu0 0.0
        %441 = vmatprep.subr.mxu0 0.0
        %442 = vmatpush1.msra.mxu0 0.0
        %443 = vmatprep.subr.mxu0 0.0
        %444 = vmatpush1.msra.mxu0 0.0
        %445 = vmatprep.subr.mxu0 0.0
        %446 = vmatpush1.msra.mxu0 0.0
        %447 = vmatprep.subr.mxu0 0.0
        %448 = vmatpush1.msra.mxu0 0.0
        %449 = vmatprep.subr.mxu0 0.0
        %450 = vmatpush1.msra.mxu0 0.0
        %451 = vmatprep.subr.mxu0 0.0
        %452 = vmatpush1.msra.mxu0 0.0
        %453 = vmatprep.subr.mxu0 0.0
        %454 = vmatpush1.msra.mxu0 0.0
        %455 = vmatprep.subr.mxu0 0.0
        %456 = vmatpush1.msra.mxu0 0.0
        %457 = vmatprep.subr.mxu0 0.0
        %458 = vmatpush1.msra.mxu0 0.0
        %459 = vmatprep.subr.mxu0 0.0
        %460 = vmatpush1.msra.mxu0 0.0
        %461 = vmatprep.subr.mxu0 0.0
        %462 = vmatpush1.msra.mxu0 0.0
        %463 = vmatprep.subr.mxu0 0.0
        %464 = vmatpush1.msra.mxu0 0.0
        %465 = vmatprep.subr.mxu0 0.0
        %466 = vmatpush1.msra.mxu0 0.0
        %467 = vmatprep.subr.mxu0 0.0
        %468 = vmatpush1.msra.mxu0 0.0
        %469 = vmatprep.subr.mxu0 0.0
        %470 = vmatpush1.msra.mxu0 0.0
        %471 = vmatprep.subr.mxu0 0.0
        %472 = vmatpush1.msra.mxu0 0.0
        %473 = vmatprep.subr.mxu0 0.0
        %474 = vmatpush1.msra.mxu0 0.0
        %475 = vmatprep.subr.mxu0 0.0
        %476 = vmatpush1.msra.mxu0 0.0
        %477 = vmatprep.subr.mxu0 0.0
        %478 = vmatpush1.msra.mxu0 0.0
        %479 = vmatprep.subr.mxu0 0.0
        %480 = vmatpush1.msra.mxu0 0.0
        %481 = vmatprep.subr.mxu0 0.0
        %482 = vmatpush1.msra.mxu0 0.0
        %483 = vmatprep.subr.mxu0 0.0
        %484 = vmatpush1.msra.mxu0 0.0
        %485 = vmatprep.subr.mxu0 0.0
        %486 = vmatpush1.msra.mxu0 0.0
        %487 = vmatprep.subr.mxu0 0.0
        %488 = vmatpush1.msra.mxu0 0.0
        %489 = vmatprep.subr.mxu0 0.0
        %490 = vmatpush1.msra.mxu0 0.0
        %491 = vmatprep.subr.mxu0 0.0
        %492 = vmatpush1.msra.mxu0 0.0
        %493 = vmatprep.subr.mxu0 0.0
        %494 = vmatpush1.msra.mxu0 0.0
        %495 = vmatprep.mubr.f32.mxu0 0.0
        %496 = vmatmul.mubr.f32.gmra.mrb[0].mxu0 %v271
        %v497 = vpop.f32.mrb[0].mxu0
        %v498 = vadd.f32 %v221, %v497
        %v499 = vpop.f32.mrb[0].mxu0
        %v500 = vadd.f32 %v221, %v499
        %501 = vmatprep.mubr.f32.mxu0 0.0
        %502 = vmatmul.mubr.f32.gmra.mrb[0].mxu0 %v274
        %v503 = vpop.f32.mrb[0].mxu0
        %v504 = vadd.f32 %v226, %v503
        %v505 = vpop.f32.mrb[0].mxu0
        %v506 = vadd.f32 %v226, %v505
        %507 = vmatprep.mubr.f32.mxu0 0.0
        %508 = vmatmul.mubr.f32.gmra.mrb[0].mxu0 %v277
        %v509 = vpop.f32.mrb[0].mxu0
        %v510 = vadd.f32 %v231, %v509
        %v511 = vpop.f32.mrb[0].mxu0
        %v512 = vadd.f32 %v231, %v511
        %513 = vmatprep.mubr.f32.mxu0 0.0
        %514 = vmatmul.mubr.f32.gmra.mrb[0].mxu0 %v280
        %v515 = vpop.f32.mrb[0].mxu0
        %v516 = vadd.f32 %v236, %v515
        %v517 = vpop.f32.mrb[0].mxu0
        %v518 = vadd.f32 %v236, %v517
        %519 = vmatprep.mubr.f32.mxu0 0.0
        %520 = vmatmul.mubr.f32.gmra.mrb[0].mxu0 %v283
        %v521 = vpop.f32.mrb[0].mxu0
        %v522 = vadd.f32 %v241, %v521
        %v523 = vpop.f32.mrb[0].mxu0
        %v524 = vadd.f32 %v241, %v523
        %525 = vmatprep.mubr.f32.mxu0 0.0
        %526 = vmatmul.mubr.f32.gmra.mrb[0].mxu0 %v286
        %v527 = vpop.f32.mrb[0].mxu0
        %v528 = vadd.f32 %v246, %v527
        %v529 = vpop.f32.mrb[0].mxu0
        %v530 = vadd.f32 %v246, %v529
        %531 = vmatprep.mubr.f32.mxu0 0.0
        %532 = vmatmul.mubr.f32.gmra.mrb[0].mxu0 %v289
        %v533 = vpop.f32.mrb[0].mxu0
        %v534 = vadd.f32 %v251, %v533
        %v535 = vpop.f32.mrb[0].mxu0
        %v536 = vadd.f32 %v251, %v535
        %537 = vdwg.mxu0
        %538 = vmatprep.subr.mxu0 %v302
        %539 = vmatpush1.msra.mxu0 %v300
        %540 = vmatprep.subr.mxu0 0.0
        %541 = vmatpush1.msra.mxu0 0.0
        %542 = vmatprep.subr.mxu0 0.0
        %543 = vmatpush1.msra.mxu0 0.0
        %544 = vmatprep.subr.mxu0 0.0
        %545 = vmatpush1.msra.mxu0 0.0
        %546 = vmatprep.subr.mxu0 0.0
        %547 = vmatpush1.msra.mxu0 0.0
        %548 = vmatprep.subr.mxu0 0.0
        %549 = vmatpush1.msra.mxu0 0.0
        %550 = vmatprep.subr.mxu0 0.0
        %551 = vmatpush1.msra.mxu0 0.0
        %552 = vmatprep.subr.mxu0 0.0
        %553 = vmatpush1.msra.mxu0 0.0
        %554 = vmatprep.subr.mxu0 0.0
        %555 = vmatpush1.msra.mxu0 0.0
        %556 = vmatprep.subr.mxu0 0.0
        %557 = vmatpush1.msra.mxu0 0.0
        %558 = vmatprep.subr.mxu0 0.0
        %559 = vmatpush1.msra.mxu0 0.0
        %560 = vmatprep.subr.mxu0 0.0
        %561 = vmatpush1.msra.mxu0 0.0
        %562 = vmatprep.subr.mxu0 0.0
        %563 = vmatpush1.msra.mxu0 0.0
        %564 = vmatprep.subr.mxu0 0.0
        %565 = vmatpush1.msra.mxu0 0.0
        %566 = vmatprep.subr.mxu0 0.0
        %567 = vmatpush1.msra.mxu0 0.0
        %568 = vmatprep.subr.mxu0 0.0
        %569 = vmatpush1.msra.mxu0 0.0
        %570 = vmatprep.subr.mxu0 0.0
        %571 = vmatpush1.msra.mxu0 0.0
        %572 = vmatprep.subr.mxu0 0.0
        %573 = vmatpush1.msra.mxu0 0.0
        %574 = vmatprep.subr.mxu0 0.0
        %575 = vmatpush1.msra.mxu0 0.0
        %576 = vmatprep.subr.mxu0 0.0
        %577 = vmatpush1.msra.mxu0 0.0
        %578 = vmatprep.subr.mxu0 0.0
        %579 = vmatpush1.msra.mxu0 0.0
        %580 = vmatprep.subr.mxu0 0.0
        %581 = vmatpush1.msra.mxu0 0.0
        %582 = vmatprep.subr.mxu0 0.0
        %583 = vmatpush1.msra.mxu0 0.0
        %584 = vmatprep.subr.mxu0 0.0
        %585 = vmatpush1.msra.mxu0 0.0
        %586 = vmatprep.subr.mxu0 0.0
        %587 = vmatpush1.msra.mxu0 0.0
        %588 = vmatprep.subr.mxu0 0.0
        %589 = vmatpush1.msra.mxu0 0.0
        %590 = vmatprep.subr.mxu0 0.0
        %591 = vmatpush1.msra.mxu0 0.0
        %592 = vmatprep.subr.mxu0 0.0
        %593 = vmatpush1.msra.mxu0 0.0
        %594 = vmatprep.subr.mxu0 0.0
        %595 = vmatpush1.msra.mxu0 0.0
        %596 = vmatprep.subr.mxu0 0.0
        %597 = vmatpush1.msra.mxu0 0.0
        %598 = vmatprep.subr.mxu0 0.0
        %599 = vmatpush1.msra.mxu0 0.0
        %600 = vmatprep.subr.mxu0 0.0
        %601 = vmatpush1.msra.mxu0 0.0
        %602 = vmatprep.mubr.f32.mxu0 0.0
        %603 = vmatmul.mubr.f32.gmra.mrb[0].mxu0 %v271
        %v604 = vpop.f32.mrb[0].mxu0
        %v605 = vadd.f32 %v221, %v604
        %v606 = vpop.f32.mrb[0].mxu0
        %v607 = vadd.f32 %v221, %v606
        %608 = vmatprep.mubr.f32.mxu0 0.0
        %609 = vmatmul.mubr.f32.gmra.mrb[0].mxu0 %v274
        %v610 = vpop.f32.mrb[0].mxu0
        %v611 = vadd.f32 %v226, %v610
        %v612 = vpop.f32.mrb[0].mxu0
        %v613 = vadd.f32 %v226, %v612
        %614 = vmatprep.mubr.f32.mxu0 0.0
        %615 = vmatmul.mubr.f32.gmra.mrb[0].mxu0 %v277
        %v616 = vpop.f32.mrb[0].mxu0
        %v617 = vadd.f32 %v231, %v616
        %v618 = vpop.f32.mrb[0].mxu0
        %v619 = vadd.f32 %v231, %v618
        %620 = vmatprep.mubr.f32.mxu0 0.0
        %621 = vmatmul.mubr.f32.gmra.mrb[0].mxu0 %v280
        %v622 = vpop.f32.mrb[0].mxu0
        %v623 = vadd.f32 %v236, %v622
        %v624 = vpop.f32.mrb[0].mxu0
        %v625 = vadd.f32 %v236, %v624
        %626 = vmatprep.mubr.f32.mxu0 0.0
        %627 = vmatmul.mubr.f32.gmra.mrb[0].mxu0 %v283
        %v628 = vpop.f32.mrb[0].mxu0
        %v629 = vadd.f32 %v241, %v628
        %v630 = vpop.f32.mrb[0].mxu0
        %v631 = vadd.f32 %v241, %v630
        %632 = vmatprep.mubr.f32.mxu0 0.0
        %633 = vmatmul.mubr.f32.gmra.mrb[0].mxu0 %v286
        %v634 = vpop.f32.mrb[0].mxu0
        %v635 = vadd.f32 %v246, %v634
        %v636 = vpop.f32.mrb[0].mxu0
        %v637 = vadd.f32 %v246, %v636
        %638 = vmatprep.mubr.f32.mxu0 0.0
        %639 = vmatmul.mubr.f32.gmra.mrb[0].mxu0 %v289
        %v640 = vpop.f32.mrb[0].mxu0
        %v641 = vadd.f32 %v251, %v640
        %v642 = vpop.f32.mrb[0].mxu0
        %v643 = vadd.f32 %v251, %v642
        %644 = vdwg.mxu0
        %645 = vmatprep.subr.mxu0 %v306
        %646 = vmatpush1.msra.mxu0 %v304
        %647 = vmatprep.subr.mxu0 0.0
        %648 = vmatpush1.msra.mxu0 0.0
        %649 = vmatprep.subr.mxu0 0.0
        %650 = vmatpush1.msra.mxu0 0.0
        %651 = vmatprep.subr.mxu0 0.0
        %652 = vmatpush1.msra.mxu0 0.0
        %653 = vmatprep.subr.mxu0 0.0
        %654 = vmatpush1.msra.mxu0 0.0
        %655 = vmatprep.subr.mxu0 0.0
        %656 = vmatpush1.msra.mxu0 0.0
        %657 = vmatprep.subr.mxu0 0.0
        %658 = vmatpush1.msra.mxu0 0.0
        %659 = vmatprep.subr.mxu0 0.0
        %660 = vmatpush1.msra.mxu0 0.0
        %661 = vmatprep.subr.mxu0 0.0
        %662 = vmatpush1.msra.mxu0 0.0
        %663 = vmatprep.subr.mxu0 0.0
        %664 = vmatpush1.msra.mxu0 0.0
        %665 = vmatprep.subr.mxu0 0.0
        %666 = vmatpush1.msra.mxu0 0.0
        %667 = vmatprep.subr.mxu0 0.0
        %668 = vmatpush1.msra.mxu0 0.0
        %669 = vmatprep.subr.mxu0 0.0
        %670 = vmatpush1.msra.mxu0 0.0
        %671 = vmatprep.subr.mxu0 0.0
        %672 = vmatpush1.msra.mxu0 0.0
        %673 = vmatprep.subr.mxu0 0.0
        %674 = vmatpush1.msra.mxu0 0.0
        %675 = vmatprep.subr.mxu0 0.0
        %676 = vmatpush1.msra.mxu0 0.0
        %677 = vmatprep.subr.mxu0 0.0
        %678 = vmatpush1.msra.mxu0 0.0
        %679 = vmatprep.subr.mxu0 0.0
        %680 = vmatpush1.msra.mxu0 0.0
        %681 = vmatprep.subr.mxu0 0.0
        %682 = vmatpush1.msra.mxu0 0.0
        %683 = vmatprep.subr.mxu0 0.0
        %684 = vmatpush1.msra.mxu0 0.0
        %685 = vmatprep.subr.mxu0 0.0
        %686 = vmatpush1.msra.mxu0 0.0
        %687 = vmatprep.subr.mxu0 0.0
        %688 = vmatpush1.msra.mxu0 0.0
        %689 = vmatprep.subr.mxu0 0.0
        %690 = vmatpush1.msra.mxu0 0.0
        %691 = vmatprep.subr.mxu0 0.0
        %692 = vmatpush1.msra.mxu0 0.0
        %693 = vmatprep.subr.mxu0 0.0
        %694 = vmatpush1.msra.mxu0 0.0
        %695 = vmatprep.subr.mxu0 0.0
        %696 = vmatpush1.msra.mxu0 0.0
        %697 = vmatprep.subr.mxu0 0.0
        %698 = vmatpush1.msra.mxu0 0.0
        %699 = vmatprep.subr.mxu0 0.0
        %700 = vmatpush1.msra.mxu0 0.0
        %701 = vmatprep.subr.mxu0 0.0
        %702 = vmatpush1.msra.mxu0 0.0
        %703 = vmatprep.subr.mxu0 0.0
        %704 = vmatpush1.msra.mxu0 0.0
        %705 = vmatprep.subr.mxu0 0.0
        %706 = vmatpush1.msra.mxu0 0.0
        %707 = vmatprep.subr.mxu0 0.0
        %708 = vmatpush1.msra.mxu0 0.0
        %709 = vmatprep.mubr.f32.mxu0 0.0
        %710 = vmatmul.mubr.f32.gmra.mrb[0].mxu0 %v271
        %v711 = vpop.f32.mrb[0].mxu0
        %v712 = vadd.f32 %v221, %v711
        %v713 = vpop.f32.mrb[0].mxu0
        %v714 = vadd.f32 %v221, %v713
        %715 = vmatprep.mubr.f32.mxu0 0.0
        %716 = vmatmul.mubr.f32.gmra.mrb[0].mxu0 %v274
        %v717 = vpop.f32.mrb[0].mxu0
        %v718 = vadd.f32 %v226, %v717
        %v719 = vpop.f32.mrb[0].mxu0
        %v720 = vadd.f32 %v226, %v719
        %721 = vmatprep.mubr.f32.mxu0 0.0
        %722 = vmatmul.mubr.f32.gmra.mrb[0].mxu0 %v277
        %v723 = vpop.f32.mrb[0].mxu0
        %v724 = vadd.f32 %v231, %v723
        %v725 = vpop.f32.mrb[0].mxu0
        %v726 = vadd.f32 %v231, %v725
        %727 = vmatprep.mubr.f32.mxu0 0.0
        %728 = vmatmul.mubr.f32.gmra.mrb[0].mxu0 %v280
        %v729 = vpop.f32.mrb[0].mxu0
        %v730 = vadd.f32 %v236, %v729
        %v731 = vpop.f32.mrb[0].mxu0
        %v732 = vadd.f32 %v236, %v731
        %733 = vmatprep.mubr.f32.mxu0 0.0
        %734 = vmatmul.mubr.f32.gmra.mrb[0].mxu0 %v283
        %v735 = vpop.f32.mrb[0].mxu0
        %v736 = vadd.f32 %v241, %v735
        %v737 = vpop.f32.mrb[0].mxu0
        %v738 = vadd.f32 %v241, %v737
        %739 = vmatprep.mubr.f32.mxu0 0.0
        %740 = vmatmul.mubr.f32.gmra.mrb[0].mxu0 %v286
        %v741 = vpop.f32.mrb[0].mxu0
        %v742 = vadd.f32 %v246, %v741
        %v743 = vpop.f32.mrb[0].mxu0
        %v744 = vadd.f32 %v246, %v743
        %745 = vmatprep.mubr.f32.mxu0 0.0
        %746 = vmatmul.mubr.f32.gmra.mrb[0].mxu0 %v289
        %v747 = vpop.f32.mrb[0].mxu0
        %v748 = vadd.f32 %v251, %v747
        %v749 = vpop.f32.mrb[0].mxu0
        %v750 = vadd.f32 %v251, %v749
        %751 = vdwg.mxu0
        %752 = vmatprep.subr.mxu0 %v310
        %753 = vmatpush1.msra.mxu0 %v308
        %754 = vmatprep.subr.mxu0 0.0
        %755 = vmatpush1.msra.mxu0 0.0
        %756 = vmatprep.subr.mxu0 0.0
        %757 = vmatpush1.msra.mxu0 0.0
        %758 = vmatprep.subr.mxu0 0.0
        %759 = vmatpush1.msra.mxu0 0.0
        %760 = vmatprep.subr.mxu0 0.0
        %761 = vmatpush1.msra.mxu0 0.0
        %762 = vmatprep.subr.mxu0 0.0
        %763 = vmatpush1.msra.mxu0 0.0
        %764 = vmatprep.subr.mxu0 0.0
        %765 = vmatpush1.msra.mxu0 0.0
        %766 = vmatprep.subr.mxu0 0.0
        %767 = vmatpush1.msra.mxu0 0.0
        %768 = vmatprep.subr.mxu0 0.0
        %769 = vmatpush1.msra.mxu0 0.0
        %770 = vmatprep.subr.mxu0 0.0
        %771 = vmatpush1.msra.mxu0 0.0
        %772 = vmatprep.subr.mxu0 0.0
        %773 = vmatpush1.msra.mxu0 0.0
        %774 = vmatprep.subr.mxu0 0.0
        %775 = vmatpush1.msra.mxu0 0.0
        %776 = vmatprep.subr.mxu0 0.0
        %777 = vmatpush1.msra.mxu0 0.0
        %778 = vmatprep.subr.mxu0 0.0
        %779 = vmatpush1.msra.mxu0 0.0
        %780 = vmatprep.subr.mxu0 0.0
        %781 = vmatpush1.msra.mxu0 0.0
        %782 = vmatprep.subr.mxu0 0.0
        %783 = vmatpush1.msra.mxu0 0.0
        %784 = vmatprep.subr.mxu0 0.0
        %785 = vmatpush1.msra.mxu0 0.0
        %786 = vmatprep.subr.mxu0 0.0
        %787 = vmatpush1.msra.mxu0 0.0
        %788 = vmatprep.subr.mxu0 0.0
        %789 = vmatpush1.msra.mxu0 0.0
        %790 = vmatprep.subr.mxu0 0.0
        %791 = vmatpush1.msra.mxu0 0.0
        %792 = vmatprep.subr.mxu0 0.0
        %793 = vmatpush1.msra.mxu0 0.0
        %794 = vmatprep.subr.mxu0 0.0
        %795 = vmatpush1.msra.mxu0 0.0
        %796 = vmatprep.subr.mxu0 0.0
        %797 = vmatpush1.msra.mxu0 0.0
        %798 = vmatprep.subr.mxu0 0.0
        %799 = vmatpush1.msra.mxu0 0.0
        %800 = vmatprep.subr.mxu0 0.0
        %801 = vmatpush1.msra.mxu0 0.0
        %802 = vmatprep.subr.mxu0 0.0
        %803 = vmatpush1.msra.mxu0 0.0
        %804 = vmatprep.subr.mxu0 0.0
        %805 = vmatpush1.msra.mxu0 0.0
        %806 = vmatprep.subr.mxu0 0.0
        %807 = vmatpush1.msra.mxu0 0.0
        %808 = vmatprep.subr.mxu0 0.0
        %809 = vmatpush1.msra.mxu0 0.0
        %810 = vmatprep.subr.mxu0 0.0
        %811 = vmatpush1.msra.mxu0 0.0
        %812 = vmatprep.subr.mxu0 0.0
        %813 = vmatpush1.msra.mxu0 0.0
        %814 = vmatprep.subr.mxu0 0.0
        %815 = vmatpush1.msra.mxu0 0.0
        %816 = vmatprep.mubr.f32.mxu0 0.0
        %817 = vmatmul.mubr.f32.gmra.mrb[0].mxu0 %v271
        %v818 = vpop.f32.mrb[0].mxu0
        %v819 = vadd.f32 %v221, %v818
        %v820 = vpop.f32.mrb[0].mxu0
        %v821 = vadd.f32 %v221, %v820
        %822 = vmatprep.mubr.f32.mxu0 0.0
        %823 = vmatmul.mubr.f32.gmra.mrb[0].mxu0 %v274
        %v824 = vpop.f32.mrb[0].mxu0
        %v825 = vadd.f32 %v226, %v824
        %v826 = vpop.f32.mrb[0].mxu0
        %v827 = vadd.f32 %v226, %v826
        %828 = vmatprep.mubr.f32.mxu0 0.0
        %829 = vmatmul.mubr.f32.gmra.mrb[0].mxu0 %v277
        %v830 = vpop.f32.mrb[0].mxu0
        %v831 = vadd.f32 %v231, %v830
        %v832 = vpop.f32.mrb[0].mxu0
        %v833 = vadd.f32 %v231, %v832
        %834 = vmatprep.mubr.f32.mxu0 0.0
        %835 = vmatmul.mubr.f32.gmra.mrb[0].mxu0 %v280
        %v836 = vpop.f32.mrb[0].mxu0
        %v837 = vadd.f32 %v236, %v836
        %v838 = vpop.f32.mrb[0].mxu0
        %v839 = vadd.f32 %v236, %v838
        %840 = vmatprep.mubr.f32.mxu0 0.0
        %841 = vmatmul.mubr.f32.gmra.mrb[0].mxu0 %v283
        %v842 = vpop.f32.mrb[0].mxu0
        %v843 = vadd.f32 %v241, %v842
        %v844 = vpop.f32.mrb[0].mxu0
        %v845 = vadd.f32 %v241, %v844
        %846 = vmatprep.mubr.f32.mxu0 0.0
        %847 = vmatmul.mubr.f32.gmra.mrb[0].mxu0 %v286
        %v848 = vpop.f32.mrb[0].mxu0
        %v849 = vadd.f32 %v246, %v848
        %v850 = vpop.f32.mrb[0].mxu0
        %v851 = vadd.f32 %v246, %v850
        %852 = vmatprep.mubr.f32.mxu0 0.0
        %853 = vmatmul.mubr.f32.gmra.mrb[0].mxu0 %v289
        %v854 = vpop.f32.mrb[0].mxu0
        %v855 = vadd.f32 %v251, %v854
        %v856 = vpop.f32.mrb[0].mxu0
        %v857 = vadd.f32 %v251, %v856
        %858 = vdwg.mxu0
        %859 = vmatprep.subr.mxu0 %v314
        %860 = vmatpush1.msra.mxu0 %v312
        %861 = vmatprep.subr.mxu0 0.0
        %862 = vmatpush1.msra.mxu0 0.0
        %863 = vmatprep.subr.mxu0 0.0
        %864 = vmatpush1.msra.mxu0 0.0
        %865 = vmatprep.subr.mxu0 0.0
        %866 = vmatpush1.msra.mxu0 0.0
        %867 = vmatprep.subr.mxu0 0.0
        %868 = vmatpush1.msra.mxu0 0.0
        %869 = vmatprep.subr.mxu0 0.0
        %870 = vmatpush1.msra.mxu0 0.0
        %871 = vmatprep.subr.mxu0 0.0
        %872 = vmatpush1.msra.mxu0 0.0
        %873 = vmatprep.subr.mxu0 0.0
        %874 = vmatpush1.msra.mxu0 0.0
        %875 = vmatprep.subr.mxu0 0.0
        %876 = vmatpush1.msra.mxu0 0.0
        %877 = vmatprep.subr.mxu0 0.0
        %878 = vmatpush1.msra.mxu0 0.0
        %879 = vmatprep.subr.mxu0 0.0
        %880 = vmatpush1.msra.mxu0 0.0
        %881 = vmatprep.subr.mxu0 0.0
        %882 = vmatpush1.msra.mxu0 0.0
        %883 = vmatprep.subr.mxu0 0.0
        %884 = vmatpush1.msra.mxu0 0.0
        %885 = vmatprep.subr.mxu0 0.0
        %886 = vmatpush1.msra.mxu0 0.0
        %887 = vmatprep.subr.mxu0 0.0
        %888 = vmatpush1.msra.mxu0 0.0
        %889 = vmatprep.subr.mxu0 0.0
        %890 = vmatpush1.msra.mxu0 0.0
        %891 = vmatprep.subr.mxu0 0.0
        %892 = vmatpush1.msra.mxu0 0.0
        %893 = vmatprep.subr.mxu0 0.0
        %894 = vmatpush1.msra.mxu0 0.0
        %895 = vmatprep.subr.mxu0 0.0
        %896 = vmatpush1.msra.mxu0 0.0
        %897 = vmatprep.subr.mxu0 0.0
        %898 = vmatpush1.msra.mxu0 0.0
        %899 = vmatprep.subr.mxu0 0.0
        %900 = vmatpush1.msra.mxu0 0.0
        %901 = vmatprep.subr.mxu0 0.0
        %902 = vmatpush1.msra.mxu0 0.0
        %903 = vmatprep.subr.mxu0 0.0
        %904 = vmatpush1.msra.mxu0 0.0
        %905 = vmatprep.subr.mxu0 0.0
        %906 = vmatpush1.msra.mxu0 0.0
        %907 = vmatprep.subr.mxu0 0.0
        %908 = vmatpush1.msra.mxu0 0.0
        %909 = vmatprep.subr.mxu0 0.0
        %910 = vmatpush1.msra.mxu0 0.0
        %911 = vmatprep.subr.mxu0 0.0
        %912 = vmatpush1.msra.mxu0 0.0
        %913 = vmatprep.subr.mxu0 0.0
        %914 = vmatpush1.msra.mxu0 0.0
        %915 = vmatprep.subr.mxu0 0.0
        %916 = vmatpush1.msra.mxu0 0.0
        %917 = vmatprep.subr.mxu0 0.0
        %918 = vmatpush1.msra.mxu0 0.0
        %919 = vmatprep.subr.mxu0 0.0
        %920 = vmatpush1.msra.mxu0 0.0
        %921 = vmatprep.subr.mxu0 0.0
        %922 = vmatpush1.msra.mxu0 0.0
        %923 = vmatprep.mubr.f32.mxu0 0.0
        %924 = vmatmul.mubr.f32.gmra.mrb[0].mxu0 %v271
        %v925 = vpop.f32.mrb[0].mxu0
        %v926 = vadd.f32 %v221, %v925
        %v927 = vpop.f32.mrb[0].mxu0
        %v928 = vadd.f32 %v221, %v927
        %929 = vmatprep.mubr.f32.mxu0 0.0
        %930 = vmatmul.mubr.f32.gmra.mrb[0].mxu0 %v274
        %v931 = vpop.f32.mrb[0].mxu0
        %v932 = vadd.f32 %v226, %v931
        %v933 = vpop.f32.mrb[0].mxu0
        %v934 = vadd.f32 %v226, %v933
        %935 = vmatprep.mubr.f32.mxu0 0.0
        %936 = vmatmul.mubr.f32.gmra.mrb[0].mxu0 %v277
        %v937 = vpop.f32.mrb[0].mxu0
        %v938 = vadd.f32 %v231, %v937
        %v939 = vpop.f32.mrb[0].mxu0
        %v940 = vadd.f32 %v231, %v939
        %941 = vmatprep.mubr.f32.mxu0 0.0
        %942 = vmatmul.mubr.f32.gmra.mrb[0].mxu0 %v280
        %v943 = vpop.f32.mrb[0].mxu0
        %v944 = vadd.f32 %v236, %v943
        %v945 = vpop.f32.mrb[0].mxu0
        %v946 = vadd.f32 %v236, %v945
        %947 = vmatprep.mubr.f32.mxu0 0.0
        %948 = vmatmul.mubr.f32.gmra.mrb[0].mxu0 %v283
        %v949 = vpop.f32.mrb[0].mxu0
        %v950 = vadd.f32 %v241, %v949
        %v951 = vpop.f32.mrb[0].mxu0
        %v952 = vadd.f32 %v241, %v951
        %953 = vmatprep.mubr.f32.mxu0 0.0
        %954 = vmatmul.mubr.f32.gmra.mrb[0].mxu0 %v286
        %v955 = vpop.f32.mrb[0].mxu0
        %v956 = vadd.f32 %v246, %v955
        %v957 = vpop.f32.mrb[0].mxu0
        %v958 = vadd.f32 %v246, %v957
        %959 = vmatprep.mubr.f32.mxu0 0.0
        %960 = vmatmul.mubr.f32.gmra.mrb[0].mxu0 %v289
        %v961 = vpop.f32.mrb[0].mxu0
        %v962 = vadd.f32 %v251, %v961
        %v963 = vpop.f32.mrb[0].mxu0
        %v964 = vadd.f32 %v251, %v963
        %965 = vdwg.mxu0
        %966 = vmatprep.subr.mxu0 %v318
        %967 = vmatpush1.msra.mxu0 %v316
        %968 = vmatprep.subr.mxu0 0.0
        %969 = vmatpush1.msra.mxu0 0.0
        %970 = vmatprep.subr.mxu0 0.0
        %971 = vmatpush1.msra.mxu0 0.0
        %972 = vmatprep.subr.mxu0 0.0
        %973 = vmatpush1.msra.mxu0 0.0
        %974 = vmatprep.subr.mxu0 0.0
        %975 = vmatpush1.msra.mxu0 0.0
        %976 = vmatprep.subr.mxu0 0.0
        %977 = vmatpush1.msra.mxu0 0.0
        %978 = vmatprep.subr.mxu0 0.0
        %979 = vmatpush1.msra.mxu0 0.0
        %980 = vmatprep.subr.mxu0 0.0
        %981 = vmatpush1.msra.mxu0 0.0
        %982 = vmatprep.subr.mxu0 0.0
        %983 = vmatpush1.msra.mxu0 0.0
        %984 = vmatprep.subr.mxu0 0.0
        %985 = vmatpush1.msra.mxu0 0.0
        %986 = vmatprep.subr.mxu0 0.0
        %987 = vmatpush1.msra.mxu0 0.0
        %988 = vmatprep.subr.mxu0 0.0
        %989 = vmatpush1.msra.mxu0 0.0
        %990 = vmatprep.subr.mxu0 0.0
        %991 = vmatpush1.msra.mxu0 0.0
        %992 = vmatprep.subr.mxu0 0.0
        %993 = vmatpush1.msra.mxu0 0.0
        %994 = vmatprep.subr.mxu0 0.0
        %995 = vmatpush1.msra.mxu0 0.0
        %996 = vmatprep.subr.mxu0 0.0
        %997 = vmatpush1.msra.mxu0 0.0
        %998 = vmatprep.subr.mxu0 0.0
        %999 = vmatpush1.msra.mxu0 0.0
        %1000 = vmatprep.subr.mxu0 0.0
        %1001 = vmatpush1.msra.mxu0 0.0
        %1002 = vmatprep.subr.mxu0 0.0
        %1003 = vmatpush1.msra.mxu0 0.0
        %1004 = vmatprep.subr.mxu0 0.0
        %1005 = vmatpush1.msra.mxu0 0.0
        %1006 = vmatprep.subr.mxu0 0.0
        %1007 = vmatpush1.msra.mxu0 0.0
        %1008 = vmatprep.subr.mxu0 0.0
        %1009 = vmatpush1.msra.mxu0 0.0
        %1010 = vmatprep.subr.mxu0 0.0
        %1011 = vmatpush1.msra.mxu0 0.0
        %1012 = vmatprep.subr.mxu0 0.0
        %1013 = vmatpush1.msra.mxu0 0.0
        %1014 = vmatprep.subr.mxu0 0.0
        %1015 = vmatpush1.msra.mxu0 0.0
        %1016 = vmatprep.subr.mxu0 0.0
        %1017 = vmatpush1.msra.mxu0 0.0
        %1018 = vmatprep.subr.mxu0 0.0
        %1019 = vmatpush1.msra.mxu0 0.0
        %1020 = vmatprep.subr.mxu0 0.0
        %1021 = vmatpush1.msra.mxu0 0.0
        %1022 = vmatprep.subr.mxu0 0.0
        %1023 = vmatpush1.msra.mxu0 0.0
        %1024 = vmatprep.subr.mxu0 0.0
        %1025 = vmatpush1.msra.mxu0 0.0
        %1026 = vmatprep.subr.mxu0 0.0
        %1027 = vmatpush1.msra.mxu0 0.0
        %1028 = vmatprep.subr.mxu0 0.0
        %1029 = vmatpush1.msra.mxu0 0.0
        %1030 = vmatprep.mubr.f32.mxu0 0.0
        %1031 = vmatmul.mubr.f32.gmra.mrb[0].mxu0 %v271
        %v1032 = vpop.f32.mrb[0].mxu0
        %v1033 = vadd.f32 %v221, %v1032
        %v1034 = vpop.f32.mrb[0].mxu0
        %v1035 = vadd.f32 %v221, %v1034
        %1036 = vmatprep.mubr.f32.mxu0 0.0
        %1037 = vmatmul.mubr.f32.gmra.mrb[0].mxu0 %v274
        %v1038 = vpop.f32.mrb[0].mxu0
        %v1039 = vadd.f32 %v226, %v1038
        %v1040 = vpop.f32.mrb[0].mxu0
        %v1041 = vadd.f32 %v226, %v1040
        %1042 = vmatprep.mubr.f32.mxu0 0.0
        %1043 = vmatmul.mubr.f32.gmra.mrb[0].mxu0 %v277
        %v1044 = vpop.f32.mrb[0].mxu0
        %v1045 = vadd.f32 %v231, %v1044
        %v1046 = vpop.f32.mrb[0].mxu0
        %v1047 = vadd.f32 %v231, %v1046
        %1048 = vmatprep.mubr.f32.mxu0 0.0
        %1049 = vmatmul.mubr.f32.gmra.mrb[0].mxu0 %v280
        %v1050 = vpop.f32.mrb[0].mxu0
        %v1051 = vadd.f32 %v236, %v1050
        %v1052 = vpop.f32.mrb[0].mxu0
        %v1053 = vadd.f32 %v236, %v1052
        %1054 = vmatprep.mubr.f32.mxu0 0.0
        %1055 = vmatmul.mubr.f32.gmra.mrb[0].mxu0 %v283
        %v1056 = vpop.f32.mrb[0].mxu0
        %v1057 = vadd.f32 %v241, %v1056
        %v1058 = vpop.f32.mrb[0].mxu0
        %v1059 = vadd.f32 %v241, %v1058
        %1060 = vmatprep.mubr.f32.mxu0 0.0
        %1061 = vmatmul.mubr.f32.gmra.mrb[0].mxu0 %v286
        %v1062 = vpop.f32.mrb[0].mxu0
        %v1063 = vadd.f32 %v246, %v1062
        %v1064 = vpop.f32.mrb[0].mxu0
        %v1065 = vadd.f32 %v246, %v1064
        %1066 = vmatprep.mubr.f32.mxu0 0.0
        %1067 = vmatmul.mubr.f32.gmra.mrb[0].mxu0 %v289
        %v1068 = vpop.f32.mrb[0].mxu0
        %v1069 = vadd.f32 %v251, %v1068
        %v1070 = vpop.f32.mrb[0].mxu0
        %v1071 = vadd.f32 %v251, %v1070
        %1072 = vdwg.mxu0
        %1073 = vmatprep.subr.mxu0 %v322
        %1074 = vmatpush1.msra.mxu0 %v320
        %1075 = vmatprep.subr.mxu0 0.0
        %1076 = vmatpush1.msra.mxu0 0.0
        %1077 = vmatprep.subr.mxu0 0.0
        %1078 = vmatpush1.msra.mxu0 0.0
        %1079 = vmatprep.subr.mxu0 0.0
        %1080 = vmatpush1.msra.mxu0 0.0
        %1081 = vmatprep.subr.mxu0 0.0
        %1082 = vmatpush1.msra.mxu0 0.0
        %1083 = vmatprep.subr.mxu0 0.0
        %1084 = vmatpush1.msra.mxu0 0.0
        %1085 = vmatprep.subr.mxu0 0.0
        %1086 = vmatpush1.msra.mxu0 0.0
        %1087 = vmatprep.subr.mxu0 0.0
        %1088 = vmatpush1.msra.mxu0 0.0
        %1089 = vmatprep.subr.mxu0 0.0
        %1090 = vmatpush1.msra.mxu0 0.0
        %1091 = vmatprep.subr.mxu0 0.0
        %1092 = vmatpush1.msra.mxu0 0.0
        %1093 = vmatprep.subr.mxu0 0.0
        %1094 = vmatpush1.msra.mxu0 0.0
        %1095 = vmatprep.subr.mxu0 0.0
        %1096 = vmatpush1.msra.mxu0 0.0
        %1097 = vmatprep.subr.mxu0 0.0
        %1098 = vmatpush1.msra.mxu0 0.0
        %1099 = vmatprep.subr.mxu0 0.0
        %1100 = vmatpush1.msra.mxu0 0.0
        %1101 = vmatprep.subr.mxu0 0.0
        %1102 = vmatpush1.msra.mxu0 0.0
        %1103 = vmatprep.subr.mxu0 0.0
        %1104 = vmatpush1.msra.mxu0 0.0
        %1105 = vmatprep.subr.mxu0 0.0
        %1106 = vmatpush1.msra.mxu0 0.0
        %1107 = vmatprep.subr.mxu0 0.0
        %1108 = vmatpush1.msra.mxu0 0.0
        %1109 = vmatprep.subr.mxu0 0.0
        %1110 = vmatpush1.msra.mxu0 0.0
        %1111 = vmatprep.subr.mxu0 0.0
        %1112 = vmatpush1.msra.mxu0 0.0
        %1113 = vmatprep.subr.mxu0 0.0
        %1114 = vmatpush1.msra.mxu0 0.0
        %1115 = vmatprep.subr.mxu0 0.0
        %1116 = vmatpush1.msra.mxu0 0.0
        %1117 = vmatprep.subr.mxu0 0.0
        %1118 = vmatpush1.msra.mxu0 0.0
        %1119 = vmatprep.subr.mxu0 0.0
        %1120 = vmatpush1.msra.mxu0 0.0
        %1121 = vmatprep.subr.mxu0 0.0
        %1122 = vmatpush1.msra.mxu0 0.0
        %1123 = vmatprep.subr.mxu0 0.0
        %1124 = vmatpush1.msra.mxu0 0.0
        %1125 = vmatprep.subr.mxu0 0.0
        %1126 = vmatpush1.msra.mxu0 0.0
        %1127 = vmatprep.subr.mxu0 0.0
        %1128 = vmatpush1.msra.mxu0 0.0
        %1129 = vmatprep.subr.mxu0 0.0
        %1130 = vmatpush1.msra.mxu0 0.0
        %1131 = vmatprep.subr.mxu0 0.0
        %1132 = vmatpush1.msra.mxu0 0.0
        %1133 = vmatprep.subr.mxu0 0.0
        %1134 = vmatpush1.msra.mxu0 0.0
        %1135 = vmatprep.subr.mxu0 0.0
        %1136 = vmatpush1.msra.mxu0 0.0
        %1137 = vmatprep.mubr.f32.mxu0 0.0
        %1138 = vmatmul.mubr.f32.gmra.mrb[0].mxu0 %v271
        %v1139 = vpop.f32.mrb[0].mxu0
        %v1140 = vadd.f32 %v221, %v1139
        %v1141 = vpop.f32.mrb[0].mxu0
        %v1142 = vadd.f32 %v221, %v1141
        %1143 = vmatprep.mubr.f32.mxu0 0.0
        %1144 = vmatmul.mubr.f32.gmra.mrb[0].mxu0 %v274
        %v1145 = vpop.f32.mrb[0].mxu0
        %v1146 = vadd.f32 %v226, %v1145
        %v1147 = vpop.f32.mrb[0].mxu0
        %v1148 = vadd.f32 %v226, %v1147
        %1149 = vmatprep.mubr.f32.mxu0 0.0
        %1150 = vmatmul.mubr.f32.gmra.mrb[0].mxu0 %v277
        %v1151 = vpop.f32.mrb[0].mxu0
        %v1152 = vadd.f32 %v231, %v1151
        %v1153 = vpop.f32.mrb[0].mxu0
        %v1154 = vadd.f32 %v231, %v1153
        %1155 = vmatprep.mubr.f32.mxu0 0.0
        %1156 = vmatmul.mubr.f32.gmra.mrb[0].mxu0 %v280
        %v1157 = vpop.f32.mrb[0].mxu0
        %v1158 = vadd.f32 %v236, %v1157
        %v1159 = vpop.f32.mrb[0].mxu0
        %v1160 = vadd.f32 %v236, %v1159
        %1161 = vmatprep.mubr.f32.mxu0 0.0
        %1162 = vmatmul.mubr.f32.gmra.mrb[0].mxu0 %v283
        %v1163 = vpop.f32.mrb[0].mxu0
        %v1164 = vadd.f32 %v241, %v1163
        %v1165 = vpop.f32.mrb[0].mxu0
        %v1166 = vadd.f32 %v241, %v1165
        %1167 = vmatprep.mubr.f32.mxu0 0.0
        %1168 = vmatmul.mubr.f32.gmra.mrb[0].mxu0 %v286
        %v1169 = vpop.f32.mrb[0].mxu0
        %v1170 = vadd.f32 %v246, %v1169
        %v1171 = vpop.f32.mrb[0].mxu0
        %v1172 = vadd.f32 %v246, %v1171
        %1173 = vmatprep.mubr.f32.mxu0 0.0
        %1174 = vmatmul.mubr.f32.gmra.mrb[0].mxu0 %v289
        %v1175 = vpop.f32.mrb[0].mxu0
        %v1176 = vadd.f32 %v251, %v1175
        %v1177 = vpop.f32.mrb[0].mxu0
        %v1178 = vadd.f32 %v251, %v1177
        %1179 = vdwg.mxu0
        %1180 = vst [vmem:[%s184] sm:$0xff] %v391
        %1181 = vst [vmem:[%s184 + $0x8] sm:$0xff] %v393
        %1182 = vst [vmem:[%s184 + $0x10] sm:$0xff] %v498
        %1183 = vst [vmem:[%s184 + $0x18] sm:$0xff] %v500
        %1184 = vst [vmem:[%s184 + $0x20] sm:$0xff] %v605
        %1185 = vst [vmem:[%s184 + $0x28] sm:$0xff] %v607
        %1186 = vst [vmem:[%s184 + $0x30] sm:$0xff] %v712
        %1187 = vst [vmem:[%s184 + $0x38] sm:$0xff] %v714
        %1188 = vst [vmem:[%s184 + $0x40] sm:$0xff] %v819
        %1189 = vst [vmem:[%s184 + $0x48] sm:$0xff] %v821
        %1190 = vst [vmem:[%s184 + $0x50] sm:$0xff] %v926
        %1191 = vst [vmem:[%s184 + $0x58] sm:$0xff] %v928
        %1192 = vst [vmem:[%s184 + $0x60] sm:$0xff] %v1033
        %1193 = vst [vmem:[%s184 + $0x68] sm:$0xff] %v1035
        %1194 = vst [vmem:[%s184 + $0x70] sm:$0xff] %v1140
        %1195 = vst [vmem:[%s184 + $0x78] sm:$0xff] %v1142
        %1196 = vst [vmem:[%s184 + $0x80] sm:$0xff] %v397
        %1197 = vst [vmem:[%s184 + $0x88] sm:$0xff] %v399
        %1198 = vst [vmem:[%s184 + $0x90] sm:$0xff] %v504
        %1199 = vst [vmem:[%s184 + $0x98] sm:$0xff] %v506
        %1200 = vst [vmem:[%s184 + $0xa0] sm:$0xff] %v611
        %1201 = vst [vmem:[%s184 + $0xa8] sm:$0xff] %v613
        %1202 = vst [vmem:[%s184 + $0xb0] sm:$0xff] %v718
        %1203 = vst [vmem:[%s184 + $0xb8] sm:$0xff] %v720
        %1204 = vst [vmem:[%s184 + $0xc0] sm:$0xff] %v825
        %1205 = vst [vmem:[%s184 + $0xc8] sm:$0xff] %v827
        %1206 = vst [vmem:[%s184 + $0xd0] sm:$0xff] %v932
        %1207 = vst [vmem:[%s184 + $0xd8] sm:$0xff] %v934
        %1208 = vst [vmem:[%s184 + $0xe0] sm:$0xff] %v1039
        %1209 = vst [vmem:[%s184 + $0xe8] sm:$0xff] %v1041
        %1210 = vst [vmem:[%s184 + $0xf0] sm:$0xff] %v1146
        %1211 = vst [vmem:[%s184 + $0xf8] sm:$0xff] %v1148
        %1212 = vst [vmem:[%s184 + $0x100] sm:$0xff] %v403
        %1213 = vst [vmem:[%s184 + $0x108] sm:$0xff] %v405
        %1214 = vst [vmem:[%s184 + $0x110] sm:$0xff] %v510
        %1215 = vst [vmem:[%s184 + $0x118] sm:$0xff] %v512
        %1216 = vst [vmem:[%s184 + $0x120] sm:$0xff] %v617
        %1217 = vst [vmem:[%s184 + $0x128] sm:$0xff] %v619
        %1218 = vst [vmem:[%s184 + $0x130] sm:$0xff] %v724
        %1219 = vst [vmem:[%s184 + $0x138] sm:$0xff] %v726
        %1220 = vst [vmem:[%s184 + $0x140] sm:$0xff] %v831
        %1221 = vst [vmem:[%s184 + $0x148] sm:$0xff] %v833
        %1222 = vst [vmem:[%s184 + $0x150] sm:$0xff] %v938
        %1223 = vst [vmem:[%s184 + $0x158] sm:$0xff] %v940
        %1224 = vst [vmem:[%s184 + $0x160] sm:$0xff] %v1045
        %1225 = vst [vmem:[%s184 + $0x168] sm:$0xff] %v1047
        %1226 = vst [vmem:[%s184 + $0x170] sm:$0xff] %v1152
        %1227 = vst [vmem:[%s184 + $0x178] sm:$0xff] %v1154
        %1228 = vst [vmem:[%s184 + $0x180] sm:$0xff] %v409
        %1229 = vst [vmem:[%s184 + $0x188] sm:$0xff] %v411
        %1230 = vst [vmem:[%s184 + $0x190] sm:$0xff] %v516
        %1231 = vst [vmem:[%s184 + $0x198] sm:$0xff] %v518
        %1232 = vst [vmem:[%s184 + $0x1a0] sm:$0xff] %v623
        %1233 = vst [vmem:[%s184 + $0x1a8] sm:$0xff] %v625
        %1234 = vst [vmem:[%s184 + $0x1b0] sm:$0xff] %v730
        %1235 = vst [vmem:[%s184 + $0x1b8] sm:$0xff] %v732
        %1236 = vst [vmem:[%s184 + $0x1c0] sm:$0xff] %v837
        %1237 = vst [vmem:[%s184 + $0x1c8] sm:$0xff] %v839
        %1238 = vst [vmem:[%s184 + $0x1d0] sm:$0xff] %v944
        %1239 = vst [vmem:[%s184 + $0x1d8] sm:$0xff] %v946
        %1240 = vst [vmem:[%s184 + $0x1e0] sm:$0xff] %v1051
        %1241 = vst [vmem:[%s184 + $0x1e8] sm:$0xff] %v1053
        %1242 = vst [vmem:[%s184 + $0x1f0] sm:$0xff] %v1158
        %1243 = vst [vmem:[%s184 + $0x1f8] sm:$0xff] %v1160
        %1244 = vst [vmem:[%s184 + $0x200] sm:$0xff] %v415
        %1245 = vst [vmem:[%s184 + $0x208] sm:$0xff] %v417
        %1246 = vst [vmem:[%s184 + $0x210] sm:$0xff] %v522
        %1247 = vst [vmem:[%s184 + $0x218] sm:$0xff] %v524
        %1248 = vst [vmem:[%s184 + $0x220] sm:$0xff] %v629
        %1249 = vst [vmem:[%s184 + $0x228] sm:$0xff] %v631
        %1250 = vst [vmem:[%s184 + $0x230] sm:$0xff] %v736
        %1251 = vst [vmem:[%s184 + $0x238] sm:$0xff] %v738
        %1252 = vst [vmem:[%s184 + $0x240] sm:$0xff] %v843
        %1253 = vst [vmem:[%s184 + $0x248] sm:$0xff] %v845
        %1254 = vst [vmem:[%s184 + $0x250] sm:$0xff] %v950
        %1255 = vst [vmem:[%s184 + $0x258] sm:$0xff] %v952
        %1256 = vst [vmem:[%s184 + $0x260] sm:$0xff] %v1057
        %1257 = vst [vmem:[%s184 + $0x268] sm:$0xff] %v1059
        %1258 = vst [vmem:[%s184 + $0x270] sm:$0xff] %v1164
        %1259 = vst [vmem:[%s184 + $0x278] sm:$0xff] %v1166
        %1260 = vst [vmem:[%s184 + $0x280] sm:$0xff] %v421
        %1261 = vst [vmem:[%s184 + $0x288] sm:$0xff] %v423
        %1262 = vst [vmem:[%s184 + $0x290] sm:$0xff] %v528
        %1263 = vst [vmem:[%s184 + $0x298] sm:$0xff] %v530
        %1264 = vst [vmem:[%s184 + $0x2a0] sm:$0xff] %v635
        %1265 = vst [vmem:[%s184 + $0x2a8] sm:$0xff] %v637
        %1266 = vst [vmem:[%s184 + $0x2b0] sm:$0xff] %v742
        %1267 = vst [vmem:[%s184 + $0x2b8] sm:$0xff] %v744
        %1268 = vst [vmem:[%s184 + $0x2c0] sm:$0xff] %v849
        %1269 = vst [vmem:[%s184 + $0x2c8] sm:$0xff] %v851
        %1270 = vst [vmem:[%s184 + $0x2d0] sm:$0xff] %v956
        %1271 = vst [vmem:[%s184 + $0x2d8] sm:$0xff] %v958
        %1272 = vst [vmem:[%s184 + $0x2e0] sm:$0xff] %v1063
        %1273 = vst [vmem:[%s184 + $0x2e8] sm:$0xff] %v1065
        %1274 = vst [vmem:[%s184 + $0x2f0] sm:$0xff] %v1170
        %1275 = vst [vmem:[%s184 + $0x2f8] sm:$0xff] %v1172
        %1276 = vst [vmem:[%s184 + $0x300] sm:$0x3f] %v427
        %1277 = vst [vmem:[%s184 + $0x308] sm:$0x3f] %v429
        %1278 = vst [vmem:[%s184 + $0x310] sm:$0x3f] %v534
        %1279 = vst [vmem:[%s184 + $0x318] sm:$0x3f] %v536
        %1280 = vst [vmem:[%s184 + $0x320] sm:$0x3f] %v641
        %1281 = vst [vmem:[%s184 + $0x328] sm:$0x3f] %v643
        %1282 = vst [vmem:[%s184 + $0x330] sm:$0x3f] %v748
        %1283 = vst [vmem:[%s184 + $0x338] sm:$0x3f] %v750
        %1284 = vst [vmem:[%s184 + $0x340] sm:$0x3f] %v855
        %1285 = vst [vmem:[%s184 + $0x348] sm:$0x3f] %v857
        %1286 = vst [vmem:[%s184 + $0x350] sm:$0x3f] %v962
        %1287 = vst [vmem:[%s184 + $0x358] sm:$0x3f] %v964
        %1288 = vst [vmem:[%s184 + $0x360] sm:$0x3f] %v1069
        %1289 = vst [vmem:[%s184 + $0x368] sm:$0x3f] %v1071
        %1290 = vst [vmem:[%s184 + $0x370] sm:$0x3f] %v1176
        %1291 = vst [vmem:[%s184 + $0x378] sm:$0x3f] %v1178
        %s1292 = sand.u32 %s106, 1
        %s1293 = sand.u32 %s106, 1
        %s1294 = smul.addr %s1293, 896
        %s1295 = scalar_lea.vmem [#allocation2], %s1294
        // Predicated region
        $region33: #{tpu_custom_call.1} parent=31 // pred_check
          %p1296 = pneg %p116
        $region34: #{tpu_custom_call.1} parent=31 // pred_check_branch
          %1298 = sbr.rel (%p1296) target = $region36
        $region35: #{tpu_custom_call.1} parent=31 // pred_region
          %s1299 = smul.u32 16, %s19
          %s1300 = smul.addr %s18, 224
          %s1301 = sadd.s32 %s1299, %s1300
          %s1302 = smul.addr %s1301, 8
          %s1303 = scalar_lea.vmem %s3, %s1302
          // Predicated region
          $region37: #{tpu_custom_call.1} parent=35 // pred_check
            _
          $region38: #{tpu_custom_call.1} parent=35 // pred_check_branch
            %1305 = sbr.rel (0) target = $region40
          $region39: #{tpu_custom_call.1} parent=35 // pred_region
            // Predicated region
            $region41: #{tpu_custom_call.1} parent=39 // pred_check
              _
            $region42: #{tpu_custom_call.1} parent=39 // pred_check_branch
              %1307 = sbr.rel (0) target = $region44
            $region43: #{tpu_custom_call.1} parent=39 // pred_region
              loop: start=0, step=1, limit=1
              $region45: #{tpu_custom_call.1} parent=43 // loop_pre_header
                _
              $region46: #{tpu_custom_call.1} parent=43 // loop_header
                %s1309 = sphi 0, %s1313
                %p1310 = scmp.ge.s32.totalorder %s1309, 1
                %s1314 = sphi %s1295, %s1295
                %s1315 = sphi %s1303, %s1303
              $region47: #{tpu_custom_call.1} parent=43 // loop_header_branch
                %1312 = sbr.rel (%p1310) target = $region51
              $region48: #{tpu_custom_call.1} parent=43 // loop_body
                %v1316 = vld [vmem:[%s1314] sm:$0xff]
                %1317 = vst [vmem:[%s1315] sm:$0xff] %v1316
                %v1318 = vld [vmem:[%s1314 + $0x8] sm:$0xff]
                %1319 = vst [vmem:[%s1315 + $0x8] sm:$0xff] %v1318
                %v1320 = vld [vmem:[%s1314 + $0x10] sm:$0xff]
                %1321 = vst [vmem:[%s1315 + $0x10] sm:$0xff] %v1320
                %v1322 = vld [vmem:[%s1314 + $0x18] sm:$0xff]
                %1323 = vst [vmem:[%s1315 + $0x18] sm:$0xff] %v1322
                %v1324 = vld [vmem:[%s1314 + $0x20] sm:$0xff]
                %1325 = vst [vmem:[%s1315 + $0x20] sm:$0xff] %v1324
                %v1326 = vld [vmem:[%s1314 + $0x28] sm:$0xff]
                %1327 = vst [vmem:[%s1315 + $0x28] sm:$0xff] %v1326
                %v1328 = vld [vmem:[%s1314 + $0x30] sm:$0xff]
                %1329 = vst [vmem:[%s1315 + $0x30] sm:$0xff] %v1328
                %v1330 = vld [vmem:[%s1314 + $0x38] sm:$0xff]
                %1331 = vst [vmem:[%s1315 + $0x38] sm:$0xff] %v1330
                %v1332 = vld [vmem:[%s1314 + $0x40] sm:$0xff]
                %1333 = vst [vmem:[%s1315 + $0x40] sm:$0xff] %v1332
                %v1334 = vld [vmem:[%s1314 + $0x48] sm:$0xff]
                %1335 = vst [vmem:[%s1315 + $0x48] sm:$0xff] %v1334
                %v1336 = vld [vmem:[%s1314 + $0x50] sm:$0xff]
                %1337 = vst [vmem:[%s1315 + $0x50] sm:$0xff] %v1336
                %v1338 = vld [vmem:[%s1314 + $0x58] sm:$0xff]
                %1339 = vst [vmem:[%s1315 + $0x58] sm:$0xff] %v1338
                %v1340 = vld [vmem:[%s1314 + $0x60] sm:$0xff]
                %1341 = vst [vmem:[%s1315 + $0x60] sm:$0xff] %v1340
                %v1342 = vld [vmem:[%s1314 + $0x68] sm:$0xff]
                %1343 = vst [vmem:[%s1315 + $0x68] sm:$0xff] %v1342
                %v1344 = vld [vmem:[%s1314 + $0x70] sm:$0xff]
                %1345 = vst [vmem:[%s1315 + $0x70] sm:$0xff] %v1344
                %v1346 = vld [vmem:[%s1314 + $0x78] sm:$0xff]
                %1347 = vst [vmem:[%s1315 + $0x78] sm:$0xff] %v1346
                %v1348 = vld [vmem:[%s1314 + $0x80] sm:$0xff]
                %1349 = vst [vmem:[%s1315 + $0x100] sm:$0xff] %v1348
                %v1350 = vld [vmem:[%s1314 + $0x88] sm:$0xff]
                %1351 = vst [vmem:[%s1315 + $0x108] sm:$0xff] %v1350
                %v1352 = vld [vmem:[%s1314 + $0x90] sm:$0xff]
                %1353 = vst [vmem:[%s1315 + $0x110] sm:$0xff] %v1352
                %v1354 = vld [vmem:[%s1314 + $0x98] sm:$0xff]
                %1355 = vst [vmem:[%s1315 + $0x118] sm:$0xff] %v1354
                %v1356 = vld [vmem:[%s1314 + $0xa0] sm:$0xff]
                %1357 = vst [vmem:[%s1315 + $0x120] sm:$0xff] %v1356
                %v1358 = vld [vmem:[%s1314 + $0xa8] sm:$0xff]
                %1359 = vst [vmem:[%s1315 + $0x128] sm:$0xff] %v1358
                %v1360 = vld [vmem:[%s1314 + $0xb0] sm:$0xff]
                %1361 = vst [vmem:[%s1315 + $0x130] sm:$0xff] %v1360
                %v1362 = vld [vmem:[%s1314 + $0xb8] sm:$0xff]
                %1363 = vst [vmem:[%s1315 + $0x138] sm:$0xff] %v1362
                %v1364 = vld [vmem:[%s1314 + $0xc0] sm:$0xff]
                %1365 = vst [vmem:[%s1315 + $0x140] sm:$0xff] %v1364
                %v1366 = vld [vmem:[%s1314 + $0xc8] sm:$0xff]
                %1367 = vst [vmem:[%s1315 + $0x148] sm:$0xff] %v1366
                %v1368 = vld [vmem:[%s1314 + $0xd0] sm:$0xff]
                %1369 = vst [vmem:[%s1315 + $0x150] sm:$0xff] %v1368
                %v1370 = vld [vmem:[%s1314 + $0xd8] sm:$0xff]
                %1371 = vst [vmem:[%s1315 + $0x158] sm:$0xff] %v1370
                %v1372 = vld [vmem:[%s1314 + $0xe0] sm:$0xff]
                %1373 = vst [vmem:[%s1315 + $0x160] sm:$0xff] %v1372
                %v1374 = vld [vmem:[%s1314 + $0xe8] sm:$0xff]
                %1375 = vst [vmem:[%s1315 + $0x168] sm:$0xff] %v1374
                %v1376 = vld [vmem:[%s1314 + $0xf0] sm:$0xff]
                %1377 = vst [vmem:[%s1315 + $0x170] sm:$0xff] %v1376
                %v1378 = vld [vmem:[%s1314 + $0xf8] sm:$0xff]
                %1379 = vst [vmem:[%s1315 + $0x178] sm:$0xff] %v1378
                %v1380 = vld [vmem:[%s1314 + $0x100] sm:$0xff]
                %1381 = vst [vmem:[%s1315 + $0x200] sm:$0xff] %v1380
                %v1382 = vld [vmem:[%s1314 + $0x108] sm:$0xff]
                %1383 = vst [vmem:[%s1315 + $0x208] sm:$0xff] %v1382
                %v1384 = vld [vmem:[%s1314 + $0x110] sm:$0xff]
                %1385 = vst [vmem:[%s1315 + $0x210] sm:$0xff] %v1384
                %v1386 = vld [vmem:[%s1314 + $0x118] sm:$0xff]
                %1387 = vst [vmem:[%s1315 + $0x218] sm:$0xff] %v1386
                %v1388 = vld [vmem:[%s1314 + $0x120] sm:$0xff]
                %1389 = vst [vmem:[%s1315 + $0x220] sm:$0xff] %v1388
                %v1390 = vld [vmem:[%s1314 + $0x128] sm:$0xff]
                %1391 = vst [vmem:[%s1315 + $0x228] sm:$0xff] %v1390
                %v1392 = vld [vmem:[%s1314 + $0x130] sm:$0xff]
                %1393 = vst [vmem:[%s1315 + $0x230] sm:$0xff] %v1392
                %v1394 = vld [vmem:[%s1314 + $0x138] sm:$0xff]
                %1395 = vst [vmem:[%s1315 + $0x238] sm:$0xff] %v1394
                %v1396 = vld [vmem:[%s1314 + $0x140] sm:$0xff]
                %1397 = vst [vmem:[%s1315 + $0x240] sm:$0xff] %v1396
                %v1398 = vld [vmem:[%s1314 + $0x148] sm:$0xff]
                %1399 = vst [vmem:[%s1315 + $0x248] sm:$0xff] %v1398
                %v1400 = vld [vmem:[%s1314 + $0x150] sm:$0xff]
                %1401 = vst [vmem:[%s1315 + $0x250] sm:$0xff] %v1400
                %v1402 = vld [vmem:[%s1314 + $0x158] sm:$0xff]
                %1403 = vst [vmem:[%s1315 + $0x258] sm:$0xff] %v1402
                %v1404 = vld [vmem:[%s1314 + $0x160] sm:$0xff]
                %1405 = vst [vmem:[%s1315 + $0x260] sm:$0xff] %v1404
                %v1406 = vld [vmem:[%s1314 + $0x168] sm:$0xff]
                %1407 = vst [vmem:[%s1315 + $0x268] sm:$0xff] %v1406
                %v1408 = vld [vmem:[%s1314 + $0x170] sm:$0xff]
                %1409 = vst [vmem:[%s1315 + $0x270] sm:$0xff] %v1408
                %v1410 = vld [vmem:[%s1314 + $0x178] sm:$0xff]
                %1411 = vst [vmem:[%s1315 + $0x278] sm:$0xff] %v1410
                %v1412 = vld [vmem:[%s1314 + $0x180] sm:$0xff]
                %1413 = vst [vmem:[%s1315 + $0x300] sm:$0xff] %v1412
                %v1414 = vld [vmem:[%s1314 + $0x188] sm:$0xff]
                %1415 = vst [vmem:[%s1315 + $0x308] sm:$0xff] %v1414
                %v1416 = vld [vmem:[%s1314 + $0x190] sm:$0xff]
                %1417 = vst [vmem:[%s1315 + $0x310] sm:$0xff] %v1416
                %v1418 = vld [vmem:[%s1314 + $0x198] sm:$0xff]
                %1419 = vst [vmem:[%s1315 + $0x318] sm:$0xff] %v1418
                %v1420 = vld [vmem:[%s1314 + $0x1a0] sm:$0xff]
                %1421 = vst [vmem:[%s1315 + $0x320] sm:$0xff] %v1420
                %v1422 = vld [vmem:[%s1314 + $0x1a8] sm:$0xff]
                %1423 = vst [vmem:[%s1315 + $0x328] sm:$0xff] %v1422
                %v1424 = vld [vmem:[%s1314 + $0x1b0] sm:$0xff]
                %1425 = vst [vmem:[%s1315 + $0x330] sm:$0xff] %v1424
                %v1426 = vld [vmem:[%s1314 + $0x1b8] sm:$0xff]
                %1427 = vst [vmem:[%s1315 + $0x338] sm:$0xff] %v1426
                %v1428 = vld [vmem:[%s1314 + $0x1c0] sm:$0xff]
                %1429 = vst [vmem:[%s1315 + $0x340] sm:$0xff] %v1428
                %v1430 = vld [vmem:[%s1314 + $0x1c8] sm:$0xff]
                %1431 = vst [vmem:[%s1315 + $0x348] sm:$0xff] %v1430
                %v1432 = vld [vmem:[%s1314 + $0x1d0] sm:$0xff]
                %1433 = vst [vmem:[%s1315 + $0x350] sm:$0xff] %v1432
                %v1434 = vld [vmem:[%s1314 + $0x1d8] sm:$0xff]
                %1435 = vst [vmem:[%s1315 + $0x358] sm:$0xff] %v1434
                %v1436 = vld [vmem:[%s1314 + $0x1e0] sm:$0xff]
                %1437 = vst [vmem:[%s1315 + $0x360] sm:$0xff] %v1436
                %v1438 = vld [vmem:[%s1314 + $0x1e8] sm:$0xff]
                %1439 = vst [vmem:[%s1315 + $0x368] sm:$0xff] %v1438
                %v1440 = vld [vmem:[%s1314 + $0x1f0] sm:$0xff]
                %1441 = vst [vmem:[%s1315 + $0x370] sm:$0xff] %v1440
                %v1442 = vld [vmem:[%s1314 + $0x1f8] sm:$0xff]
                %1443 = vst [vmem:[%s1315 + $0x378] sm:$0xff] %v1442
                %v1444 = vld [vmem:[%s1314 + $0x200] sm:$0xff]
                %1445 = vst [vmem:[%s1315 + $0x400] sm:$0xff] %v1444
                %v1446 = vld [vmem:[%s1314 + $0x208] sm:$0xff]
                %1447 = vst [vmem:[%s1315 + $0x408] sm:$0xff] %v1446
                %v1448 = vld [vmem:[%s1314 + $0x210] sm:$0xff]
                %1449 = vst [vmem:[%s1315 + $0x410] sm:$0xff] %v1448
                %v1450 = vld [vmem:[%s1314 + $0x218] sm:$0xff]
                %1451 = vst [vmem:[%s1315 + $0x418] sm:$0xff] %v1450
                %v1452 = vld [vmem:[%s1314 + $0x220] sm:$0xff]
                %1453 = vst [vmem:[%s1315 + $0x420] sm:$0xff] %v1452
                %v1454 = vld [vmem:[%s1314 + $0x228] sm:$0xff]
                %1455 = vst [vmem:[%s1315 + $0x428] sm:$0xff] %v1454
                %v1456 = vld [vmem:[%s1314 + $0x230] sm:$0xff]
                %1457 = vst [vmem:[%s1315 + $0x430] sm:$0xff] %v1456
                %v1458 = vld [vmem:[%s1314 + $0x238] sm:$0xff]
                %1459 = vst [vmem:[%s1315 + $0x438] sm:$0xff] %v1458
                %v1460 = vld [vmem:[%s1314 + $0x240] sm:$0xff]
                %1461 = vst [vmem:[%s1315 + $0x440] sm:$0xff] %v1460
                %v1462 = vld [vmem:[%s1314 + $0x248] sm:$0xff]
                %1463 = vst [vmem:[%s1315 + $0x448] sm:$0xff] %v1462
                %v1464 = vld [vmem:[%s1314 + $0x250] sm:$0xff]
                %1465 = vst [vmem:[%s1315 + $0x450] sm:$0xff] %v1464
                %v1466 = vld [vmem:[%s1314 + $0x258] sm:$0xff]
                %1467 = vst [vmem:[%s1315 + $0x458] sm:$0xff] %v1466
                %v1468 = vld [vmem:[%s1314 + $0x260] sm:$0xff]
                %1469 = vst [vmem:[%s1315 + $0x460] sm:$0xff] %v1468
                %v1470 = vld [vmem:[%s1314 + $0x268] sm:$0xff]
                %1471 = vst [vmem:[%s1315 + $0x468] sm:$0xff] %v1470
                %v1472 = vld [vmem:[%s1314 + $0x270] sm:$0xff]
                %1473 = vst [vmem:[%s1315 + $0x470] sm:$0xff] %v1472
                %v1474 = vld [vmem:[%s1314 + $0x278] sm:$0xff]
                %1475 = vst [vmem:[%s1315 + $0x478] sm:$0xff] %v1474
                %v1476 = vld [vmem:[%s1314 + $0x280] sm:$0xff]
                %1477 = vst [vmem:[%s1315 + $0x500] sm:$0xff] %v1476
                %v1478 = vld [vmem:[%s1314 + $0x288] sm:$0xff]
                %1479 = vst [vmem:[%s1315 + $0x508] sm:$0xff] %v1478
                %v1480 = vld [vmem:[%s1314 + $0x290] sm:$0xff]
                %1481 = vst [vmem:[%s1315 + $0x510] sm:$0xff] %v1480
                %v1482 = vld [vmem:[%s1314 + $0x298] sm:$0xff]
                %1483 = vst [vmem:[%s1315 + $0x518] sm:$0xff] %v1482
                %v1484 = vld [vmem:[%s1314 + $0x2a0] sm:$0xff]
                %1485 = vst [vmem:[%s1315 + $0x520] sm:$0xff] %v1484
                %v1486 = vld [vmem:[%s1314 + $0x2a8] sm:$0xff]
                %1487 = vst [vmem:[%s1315 + $0x528] sm:$0xff] %v1486
                %v1488 = vld [vmem:[%s1314 + $0x2b0] sm:$0xff]
                %1489 = vst [vmem:[%s1315 + $0x530] sm:$0xff] %v1488
                %v1490 = vld [vmem:[%s1314 + $0x2b8] sm:$0xff]
                %1491 = vst [vmem:[%s1315 + $0x538] sm:$0xff] %v1490
                %v1492 = vld [vmem:[%s1314 + $0x2c0] sm:$0xff]
                %1493 = vst [vmem:[%s1315 + $0x540] sm:$0xff] %v1492
                %v1494 = vld [vmem:[%s1314 + $0x2c8] sm:$0xff]
                %1495 = vst [vmem:[%s1315 + $0x548] sm:$0xff] %v1494
                %v1496 = vld [vmem:[%s1314 + $0x2d0] sm:$0xff]
                %1497 = vst [vmem:[%s1315 + $0x550] sm:$0xff] %v1496
                %v1498 = vld [vmem:[%s1314 + $0x2d8] sm:$0xff]
                %1499 = vst [vmem:[%s1315 + $0x558] sm:$0xff] %v1498
                %v1500 = vld [vmem:[%s1314 + $0x2e0] sm:$0xff]
                %1501 = vst [vmem:[%s1315 + $0x560] sm:$0xff] %v1500
                %v1502 = vld [vmem:[%s1314 + $0x2e8] sm:$0xff]
                %1503 = vst [vmem:[%s1315 + $0x568] sm:$0xff] %v1502
                %v1504 = vld [vmem:[%s1314 + $0x2f0] sm:$0xff]
                %1505 = vst [vmem:[%s1315 + $0x570] sm:$0xff] %v1504
                %v1506 = vld [vmem:[%s1314 + $0x2f8] sm:$0xff]
                %1507 = vst [vmem:[%s1315 + $0x578] sm:$0xff] %v1506
                %v1508 = vld [vmem:[%s1314 + $0x300] sm:$0xff]
                %1509 = vst [vmem:[%s1315 + $0x600] sm:$0xff] %v1508
                %v1510 = vld [vmem:[%s1314 + $0x308] sm:$0xff]
                %1511 = vst [vmem:[%s1315 + $0x608] sm:$0xff] %v1510
                %v1512 = vld [vmem:[%s1314 + $0x310] sm:$0xff]
                %1513 = vst [vmem:[%s1315 + $0x610] sm:$0xff] %v1512
                %v1514 = vld [vmem:[%s1314 + $0x318] sm:$0xff]
                %1515 = vst [vmem:[%s1315 + $0x618] sm:$0xff] %v1514
                %v1516 = vld [vmem:[%s1314 + $0x320] sm:$0xff]
                %1517 = vst [vmem:[%s1315 + $0x620] sm:$0xff] %v1516
                %v1518 = vld [vmem:[%s1314 + $0x328] sm:$0xff]
                %1519 = vst [vmem:[%s1315 + $0x628] sm:$0xff] %v1518
                %v1520 = vld [vmem:[%s1314 + $0x330] sm:$0xff]
                %1521 = vst [vmem:[%s1315 + $0x630] sm:$0xff] %v1520
                %v1522 = vld [vmem:[%s1314 + $0x338] sm:$0xff]
                %1523 = vst [vmem:[%s1315 + $0x638] sm:$0xff] %v1522
                %v1524 = vld [vmem:[%s1314 + $0x340] sm:$0xff]
                %1525 = vst [vmem:[%s1315 + $0x640] sm:$0xff] %v1524
                %v1526 = vld [vmem:[%s1314 + $0x348] sm:$0xff]
                %1527 = vst [vmem:[%s1315 + $0x648] sm:$0xff] %v1526
                %v1528 = vld [vmem:[%s1314 + $0x350] sm:$0xff]
                %1529 = vst [vmem:[%s1315 + $0x650] sm:$0xff] %v1528
                %v1530 = vld [vmem:[%s1314 + $0x358] sm:$0xff]
                %1531 = vst [vmem:[%s1315 + $0x658] sm:$0xff] %v1530
                %v1532 = vld [vmem:[%s1314 + $0x360] sm:$0xff]
                %1533 = vst [vmem:[%s1315 + $0x660] sm:$0xff] %v1532
                %v1534 = vld [vmem:[%s1314 + $0x368] sm:$0xff]
                %1535 = vst [vmem:[%s1315 + $0x668] sm:$0xff] %v1534
                %v1536 = vld [vmem:[%s1314 + $0x370] sm:$0xff]
                %1537 = vst [vmem:[%s1315 + $0x670] sm:$0xff] %v1536
                %v1538 = vld [vmem:[%s1314 + $0x378] sm:$0xff]
                %1539 = vst [vmem:[%s1315 + $0x678] sm:$0xff] %v1538
              $region49: #{tpu_custom_call.1} parent=43 // loop_footer
                %s1313 = sadd.s32 1, %s1309
              $region50: #{tpu_custom_call.1} parent=43 // loop_footer_branch
                %1308 = sbr.rel target = $region46
              $region51: #{tpu_custom_call.1} parent=43 // loop_exit
                _
            $region44: #{tpu_custom_call.1} parent=39 // pred_fallthru
              _
            // Predicated region
            $region52: #{tpu_custom_call.1} parent=39 // pred_check
              _
            $region53: #{tpu_custom_call.1} parent=39 // pred_check_branch
              %1541 = sbr.rel target = $region55
            $region54: #{tpu_custom_call.1} parent=39 // pred_region
              _
            $region55: #{tpu_custom_call.1} parent=39 // pred_fallthru
              _
          $region40: #{tpu_custom_call.1} parent=35 // pred_fallthru
            _
          %1542 = vnop
        $region36: #{tpu_custom_call.1} parent=31 // pred_fallthru
          _
      $region32: #{tpu_custom_call.1} parent=5 // pred_fallthru
        _
      %p1543 = scmp.le.s32.totalorder 2, %s9
      // Predicated region
      $region56: #{tpu_custom_call.1} parent=5 // pred_check
        %p1544 = pneg %p1543
      $region57: #{tpu_custom_call.1} parent=5 // pred_check_branch
        %1546 = sbr.rel (%p1544) target = $region59
      $region58: #{tpu_custom_call.1} parent=5 // pred_region
        %s1547 = ssub.s32 %s9, 2
        // Predicated region
        $region60: #{tpu_custom_call.1} parent=58 // pred_check
          %p1548 = pneg %p122
        $region61: #{tpu_custom_call.1} parent=58 // pred_check_branch
          %1550 = sbr.rel (%p1548) target = $region63
        $region62: #{tpu_custom_call.1} parent=58 // pred_region
          %s1551 = sand.u32 %s107, 1
          %s1552 = sand.u32 %s107, 1
          %s1553 = smul.addr %s1552, 896
          %s1554 = scalar_lea.vmem [#allocation2], %s1553
        $region63: #{tpu_custom_call.1} parent=58 // pred_fallthru
          _
      $region59: #{tpu_custom_call.1} parent=5 // pred_fallthru
        _
    $region6: #{tpu_custom_call.1} parent=1 // loop_footer
      %s13 = sadd.s32 1, %s9
    $region7: #{tpu_custom_call.1} parent=1 // loop_footer_branch
      %8 = sbr.rel target = $region3
    $region8: #{tpu_custom_call.1} parent=1 // loop_exit
      _

</llo_original>
